<compile_context>
chip_gen: v7x
topology: tpu7x:2x2x1
jax: 0.10.0
libtpu: 0.0.40
codegen_flags: <defaults>
</compile_context>

<pallas_src>
import jax
import jax.numpy as jnp
from jax.experimental import pallas as pl
from jax.experimental.pallas import tpu as pltpu


def lstm_forward(x, wx, wh, b, wp, bp, *, time_chunk=None, batch_chunks=1,
                 core_parallel_batch=False, vmem_budget_bytes=None):
    """x: (B, T, D) f32; stacked params as produced by make_params.
    Returns logits (B, num_classes)."""
    B, T, D = x.shape
    H = wh.shape[-1]
    G = 4 * H

    # ---- fuse gates along the lane axis: [g | i | f | o] -> width 4H --------
    wx_f = jnp.transpose(wx, (1, 0, 2)).reshape(D, G).astype(jnp.bfloat16)
    wh_f = jnp.transpose(wh, (1, 0, 2)).reshape(H, G).astype(jnp.bfloat16)
    b_f = jnp.transpose(b, (1, 0, 2)).reshape(1, G)               # f32

    # ---- batch padding so every batch chunk is sublane (8) aligned ----------
    B_mult = 8 * batch_chunks
    B_pad = ((B + B_mult - 1) // B_mult) * B_mult
    if B_pad != B:
        x = jnp.pad(x, ((0, B_pad - B), (0, 0), (0, 0)))
    Bc = B_pad // batch_chunks

    # ---- generation-aware VMEM budget & time_chunk sizing -------------------
    try:
        vmem_cap = int(pltpu.get_tpu_info().vmem_capacity_bytes)
    except Exception:
        vmem_cap = 64 * 2**20          # conservative (v7x per-TC VMEM)
    if vmem_budget_bytes is None:
        vmem_budget_bytes = (vmem_cap * 3) // 4      # leave headroom
    vmem_budget_bytes = min(vmem_budget_bytes, vmem_cap - 2 * 2**20)

    # Resident bytes independent of Tc (assume double-buffered weights even
    # though we request Buffered(1) — conservative).
    fixed = (2 * D * G * 2           # fused Wx, bf16
             + 2 * H * G * 2         # fused Wh, bf16
             + 2 * 8 * G * 4         # fused bias (sublane-padded), f32
             + 2 * Bc * H * 4        # resident output block
             + Bc * H * 2 + Bc * H * 4)          # h (bf16) + c (f32) scratch
    per_tc = 2 * Bc * D * 4 + Bc * G * 4         # x chunk (x2 bufs) + xp scratch
    if time_chunk is None:
        tc_fit = max(1, (vmem_budget_bytes - fixed) // per_tc)
        time_chunk = int(min(T, tc_fit, 256))
    Tc = max(1, min(int(time_chunk), T))
    nt = pl.cdiv(T, Tc)
    T_pad = nt * Tc
    needs_mask = (T_pad != T)

    resident_est = fixed + per_tc * Tc
    vmem_limit = int(min(vmem_cap,
                         max(vmem_budget_bytes, resident_est * 5 // 4,
                             16 * 2**20)))

    # Full unroll only for tiny gate blocks; moderate unroll otherwise to keep
    # live f32 gate tiles within the vreg file (review item).
    gate_bytes = Bc * G * 4
    unroll = Tc if gate_bytes <= 32 * 1024 else min(4, Tc)

    # ---- time-major x, padded along time with zeros -------------------------
    x_t = jnp.transpose(x, (1, 0, 2))            # (T, B_pad, D)
    if needs_mask:
        x_t = jnp.pad(x_t, ((0, T_pad - T), (0, 0), (0, 0)))

    # ---- megacore semantics for the batch axis -------------------------------
    if core_parallel_batch and batch_chunks > 1:
        # Per-core VMEM scratch => no h/c race across cores; re-verify on v7x.
        batch_sem = pltpu.CORE_PARALLEL
    else:
        batch_sem = "parallel" if batch_chunks > 1 else "arbitrary"

    seq_len = T

    # ------------------------------ kernel ------------------------------------
    def kernel(x_ref, wx_ref, wh_ref, b_ref, out_ref, h_ref, c_ref, xp_ref):
        t_chunk = pl.program_id(1)

        @pl.when(t_chunk == 0)
        def _init():
            h_ref[...] = jnp.zeros_like(h_ref)
            c_ref[...] = jnp.zeros_like(c_ref)

        tc, bc, d = x_ref.shape
        hd = h_ref.shape[-1]

        # Chunk prologue: fused input projection for the whole chunk with a
        # single MXU matmul (bf16 inputs, f32 accumulation) + fused bias.
        x_chunk = x_ref[...].reshape(tc * bc, d).astype(jnp.bfloat16)
        xp_ref[...] = (
            jnp.dot(x_chunk, wx_ref[...], preferred_element_type=jnp.float32)
            + b_ref[...])

        wh_v = wh_ref[...]                   # (H, 4H) bf16, resident

        def step(i, carry):
            h, c = carry                     # h: (Bc,H) bf16, c: (Bc,H) f32
            row = pl.multiple_of(i * bc, bc)
            xp = xp_ref[pl.ds(row, bc), :]   # (Bc, 4H) f32
            gates = xp + jnp.dot(h, wh_v, preferred_element_type=jnp.float32)
            g = jnp.tanh(gates[:, 0:hd])
            sig = jax.nn.sigmoid(gates[:, hd:4 * hd])   # one EUP stream: i,f,o
            ig = sig[:, 0:hd]
            f = sig[:, hd:2 * hd]
            o = sig[:, 2 * hd:3 * hd]
            c_new = g * ig + c * f
            h_new = (jnp.tanh(c_new) * o).astype(jnp.bfloat16)
            if needs_mask:                   # trace-time branch
                valid = (t_chunk * tc + i) < seq_len
                h_new = jnp.where(valid, h_new, h)
                c_new = jnp.where(valid, c_new, c)
            return h_new, c_new

        h, c = jax.lax.fori_loop(0, tc, step, (h_ref[...], c_ref[...]),
                                 unroll=unroll)
        h_ref[...] = h
        c_ref[...] = c

        @pl.when(t_chunk == pl.num_programs(1) - 1)
        def _finalize():
            out_ref[...] = h.astype(out_ref.dtype)   # resident block -> h_T

    # ---------------------------- pallas_call ----------------------------------
    def build_specs(single_buffer_weights):
        if single_buffer_weights:
            def wspec(shp):
                return pl.BlockSpec(shp, lambda bb, tt: (0, 0),
                                    pipeline_mode=pl.Buffered(1))
        else:
            def wspec(shp):
                return pl.BlockSpec(shp, lambda bb, tt: (0, 0))
        in_specs = [
            pl.BlockSpec((Tc, Bc, D), lambda bb, tt: (tt, bb, 0)),   # x chunk
            wspec((D, G)),                                           # Wx fused
            wspec((H, G)),                                           # Wh fused
            wspec((1, G)),                                           # bias fused
        ]
        out_spec = pl.BlockSpec((Bc, H), lambda bb, tt: (bb, 0))
        return in_specs, out_spec

    def run(single_buffer_weights):
        in_specs, out_spec = build_specs(single_buffer_weights)
        return pl.pallas_call(
            kernel,
            out_shape=jax.ShapeDtypeStruct((B_pad, H), jnp.float32),
            grid_spec=pltpu.PrefetchScalarGridSpec(
                num_scalar_prefetch=0,
                grid=(batch_chunks, nt),          # time innermost (sequential)
                in_specs=in_specs,
                out_specs=out_spec,
                scratch_shapes=[
                    pltpu.VMEM((Bc, H), jnp.bfloat16),       # h state
                    pltpu.VMEM((Bc, H), jnp.float32),        # c state
                    pltpu.VMEM((Tc * Bc, G), jnp.float32),   # per-chunk x-proj
                ],
            ),
            compiler_params=pltpu.CompilerParams(
                dimension_semantics=(batch_sem, "arbitrary"),
                vmem_limit_bytes=vmem_limit),
        )(x_t, wx_f, wh_f, b_f)

    try:
        h_T = run(True)       # single-buffer constant-index weights
    except Exception:
        h_T = run(False)      # pipeline_mode/Buffered(1) unsupported: fall back

    h_T = h_T[:B]
    # Final projection applied once, in XLA, on the kernel's h_T output.
    return h_T @ wp + bp


# ------------------------------ params & refs ---------------------------------
def xavier_uniform(key, fan_in, fan_out):
    bound = (6.0 / (fan_in + fan_out)) ** 0.5
    return jax.random.uniform(key, (fan_in, fan_out), jnp.float32, -bound, bound)


def make_params(key, input_dim, num_hidden, num_classes):
    keys = jax.random.split(key, 9)
    # gate order: [g, i, f, o]
    Wgx, Wix, Wfx, Wox = (xavier_uniform(keys[k], input_dim, num_hidden) for k in range(4))
    Wgh, Wih, Wfh, Woh = (xavier_uniform(keys[4 + k], num_hidden, num_hidden) for k in range(4))
    Wph = xavier_uniform(keys[8], num_hidden, num_classes)
    wx = jnp.stack([Wgx, Wix, Wfx, Wox], axis=0)               # (4, D, H)
    wh = jnp.stack([Wgh, Wih, Wfh, Woh], axis=0)               # (4, H, H)
    b = jnp.stack([jnp.zeros((1, num_hidden), jnp.float32),    # bg
                   jnp.zeros((1, num_hidden), jnp.float32),    # bi
                   jnp.ones((1, num_hidden), jnp.float32),     # bf (PyTorch init)
                   jnp.zeros((1, num_hidden), jnp.float32)],   # bo
                  axis=0)                                      # (4, 1, H)
    bp = jnp.zeros((1, num_classes), jnp.float32)
    return wx, wh, b, Wph, bp


def lstm_reference(x, wx, wh, b, wp, bp):
    """Pure-f32 reference matching the PyTorch module exactly."""
    B, T, D = x.shape
    H = wh.shape[-1]
    h = jnp.zeros((B, H), jnp.float32)
    c = jnp.zeros((B, H), jnp.float32)
    for t in range(T):
        xt = x[:, t, :]
        g = jnp.tanh(xt @ wx[0] + h @ wh[0] + b[0])
        i = jax.nn.sigmoid(xt @ wx[1] + h @ wh[1] + b[1])
        f = jax.nn.sigmoid(xt @ wx[2] + h @ wh[2] + b[2])
        o = jax.nn.sigmoid(xt @ wx[3] + h @ wh[3] + b[3])
        c = g * i + c * f
        h = jnp.tanh(c) * o
    return h @ wp + bp


def lstm_reference_mixed(x, wx, wh, b, wp, bp):
    """Reference mirroring the kernel's precision: fused gates, bf16 matmul
    inputs (x, Wx, h, Wh), f32 accumulation, f32 c / gates, bf16 h carry."""
    B, T, D = x.shape
    H = wh.shape[-1]
    G = 4 * H
    wx_f = jnp.transpose(wx, (1, 0, 2)).reshape(D, G).astype(jnp.bfloat16)
    wh_f = jnp.transpose(wh, (1, 0, 2)).reshape(H, G).astype(jnp.bfloat16)
    b_f = jnp.transpose(b, (1, 0, 2)).reshape(1, G)
    x_proj = jnp.dot(x.astype(jnp.bfloat16).reshape(B * T, D), wx_f,
                     preferred_element_type=jnp.float32).reshape(B, T, G) + b_f
    h = jnp.zeros((B, H), jnp.bfloat16)
    c = jnp.zeros((B, H), jnp.float32)
    for t in range(T):
        gates = x_proj[:, t, :] + jnp.dot(h, wh_f,
                                          preferred_element_type=jnp.float32)
        g = jnp.tanh(gates[:, 0:H])
        sig = jax.nn.sigmoid(gates[:, H:4 * H])
        i = sig[:, 0:H]
        f = sig[:, H:2 * H]
        o = sig[:, 2 * H:3 * H]
        c = g * i + c * f
        h = (jnp.tanh(c) * o).astype(jnp.bfloat16)
    return h.astype(jnp.float32) @ wp + bp


if __name__ == "__main__":
    batch = 8
    seq_length = 8
    input_dim = 4
    num_hidden = 32
    num_classes = 10

    key = jax.random.PRNGKey(0)
    k_x, k_p = jax.random.split(key)
    x = jax.random.normal(k_x, (batch, seq_length, input_dim), jnp.float32)
    wx, wh, b, wp, bp = make_params(k_p, input_dim, num_hidden, num_classes)

    out = lstm_forward(x, wx, wh, b, wp, bp)
    out = jax.block_until_ready(out)
    assert out.shape == (batch, num_classes)

    # Tight check vs a reference with the kernel's mixed precision; loose check
    # vs the pure-f32 PyTorch-equivalent reference (bf16 recurrent inputs).
    ref_mixed = lstm_reference_mixed(x, wx, wh, b, wp, bp)
    ref_f32 = lstm_reference(x, wx, wh, b, wp, bp)
    assert jnp.allclose(out, ref_mixed, atol=2e-3, rtol=2e-3), \
        "mismatch vs mixed-precision reference"
    assert jnp.allclose(out, ref_f32, atol=5e-2, rtol=5e-2), \
        "mismatch vs f32 reference"

    # Also exercise the time-padding / masked-step path (T not a multiple of
    # the chunk): T=8 with Tc=3 -> padded to 9 with one masked step.
    out_pad = lstm_forward(x, wx, wh, b, wp, bp, time_chunk=3)
    out_pad = jax.block_until_ready(out_pad)
    assert jnp.allclose(out_pad, ref_mixed, atol=2e-3, rtol=2e-3), \
        "mismatch on padded/masked time-chunk path"

    print("KERNEL_OK")
</pallas_src>

<mosaic_0001>
module attributes {stable_mosaic.version = 11 : i64} {
  func.func @kernel(%arg0: i32, %arg1: i32, %arg2: memref<8x8x4xf32, #tpu.memory_space<vmem>>, %arg3: memref<4x128xbf16, #tpu.memory_space<vmem>>, %arg4: memref<32x128xbf16, #tpu.memory_space<vmem>>, %arg5: memref<1x128xf32, #tpu.memory_space<vmem>>, %arg6: memref<8x32xf32, #tpu.memory_space<vmem>>, %arg7: memref<8x32xbf16, #tpu.memory_space<vmem>>, %arg8: memref<8x32xf32, #tpu.memory_space<vmem>>, %arg9: memref<64x128xf32, #tpu.memory_space<vmem>>) attributes {dimension_semantics = [#tpu.dimension_semantics<arbitrary>, #tpu.dimension_semantics<arbitrary>], iteration_bounds = array<i64: 1, 1>, scalar_prefetch = 0 : i64, scratch_operands = 3 : i64, tpu.core_type = #tpu.core_type<tc>, window_params = [{transform_indices = @transform_0, window_bounds = array<i64: 8, 8, 4>}, {pipeline_mode = #tpu.pipeline_mode<synchronous>, transform_indices = @transform_1, window_bounds = array<i64: 4, 128>}, {pipeline_mode = #tpu.pipeline_mode<synchronous>, transform_indices = @transform_2, window_bounds = array<i64: 32, 128>}, {pipeline_mode = #tpu.pipeline_mode<synchronous>, transform_indices = @transform_3, window_bounds = array<i64: 1, 128>}, {transform_indices = @transform_4, window_bounds = array<i64: 8, 32>}]} {
    %c0_i32 = arith.constant 0 : i32
    %0 = arith.cmpi eq, %arg1, %c0_i32 : i32
    %1 = arith.extui %0 : i1 to i32
    %c0_i32_0 = arith.constant 0 : i32
    %2 = arith.cmpi ne, %1, %c0_i32_0 : i32
    scf.if %2 {
      %cst_54 = arith.constant 0.000000e+00 : bf16
      %204 = vector.broadcast %cst_54 : bf16 to vector<8x32xbf16>
      %c0_55 = arith.constant 0 : index
      %c0_56 = arith.constant 0 : index
      %205 = vector.load %arg7[%c0_55, %c0_56] : memref<8x32xbf16, #tpu.memory_space<vmem>>, vector<8x32xbf16>
      tpu.vector_store %arg7[%c0_55, %c0_56], %204 {strides = array<i32>} : memref<8x32xbf16, #tpu.memory_space<vmem>>, vector<8x32xbf16>,
      %cst_57 = arith.constant 0.000000e+00 : f32
      %206 = vector.broadcast %cst_57 : f32 to vector<8x32xf32>
      %c0_58 = arith.constant 0 : index
      %c0_59 = arith.constant 0 : index
      %207 = vector.load %arg8[%c0_58, %c0_59] : memref<8x32xf32, #tpu.memory_space<vmem>>, vector<8x32xf32>
      tpu.vector_store %arg8[%c0_58, %c0_59], %206 {strides = array<i32>} : memref<8x32xf32, #tpu.memory_space<vmem>>, vector<8x32xf32>,
    } else {
    }
    %c0 = arith.constant 0 : index
    %c0_1 = arith.constant 0 : index
    %c0_2 = arith.constant 0 : index
    %3 = vector.load %arg2[%c0, %c0_1, %c0_2] : memref<8x8x4xf32, #tpu.memory_space<vmem>>, vector<8x8x4xf32>
    %4 = vector.shape_cast %3 : vector<8x8x4xf32> to vector<64x4xf32>
    %5 = arith.truncf %4 : vector<64x4xf32> to vector<64x4xbf16>
    %c0_3 = arith.constant 0 : index
    %c0_4 = arith.constant 0 : index
    %6 = vector.load %arg3[%c0_3, %c0_4] : memref<4x128xbf16, #tpu.memory_space<vmem>>, vector<4x128xbf16>
    %cst = arith.constant dense<0.000000e+00> : vector<64x128xf32>
    %7 = tpu.matmul %5, %6, %cst {dimension_numbers = #tpu.dot_dimension_numbers<[1], [0], [0], [1], [0, 0, 1, 1], [], []>} : vector<64x4xbf16>, vector<4x128xbf16>, vector<64x128xf32> -> vector<64x128xf32>
    %c0_5 = arith.constant 0 : index
    %c0_6 = arith.constant 0 : index
    %8 = vector.load %arg5[%c0_5, %c0_6] : memref<1x128xf32, #tpu.memory_space<vmem>>, vector<1x128xf32>
    %9 = vector.broadcast %8 : vector<1x128xf32> to vector<64x128xf32>
    %10 = arith.addf %7, %9 : vector<64x128xf32>
    %c0_7 = arith.constant 0 : index
    %c0_8 = arith.constant 0 : index
    %11 = vector.load %arg9[%c0_7, %c0_8] : memref<64x128xf32, #tpu.memory_space<vmem>>, vector<64x128xf32>
    tpu.vector_store %arg9[%c0_7, %c0_8], %10 {strides = array<i32>} : memref<64x128xf32, #tpu.memory_space<vmem>>, vector<64x128xf32>,
    %c0_9 = arith.constant 0 : index
    %c0_10 = arith.constant 0 : index
    %12 = vector.load %arg4[%c0_9, %c0_10] : memref<32x128xbf16, #tpu.memory_space<vmem>>, vector<32x128xbf16>
    %c0_11 = arith.constant 0 : index
    %c0_12 = arith.constant 0 : index
    %13 = vector.load %arg7[%c0_11, %c0_12] : memref<8x32xbf16, #tpu.memory_space<vmem>>, vector<8x32xbf16>
    %c0_13 = arith.constant 0 : index
    %c0_14 = arith.constant 0 : index
    %14 = vector.load %arg8[%c0_13, %c0_14] : memref<8x32xf32, #tpu.memory_space<vmem>>, vector<8x32xf32>
    %c0_i32_15 = arith.constant 0 : i32
    %c8_i32 = arith.constant 8 : i32
    %15 = arith.muli %c0_i32_15, %c8_i32 : i32
    %16 = tpu.assume_multiple %15, 8 : i32
    %17 = arith.index_cast %16 : i32 to index
    %c0_16 = arith.constant 0 : index
    %18 = vector.load %arg9[%17, %c0_16] : memref<64x128xf32, #tpu.memory_space<vmem>>, vector<8x128xf32>
    %cst_17 = arith.constant dense<0.000000e+00> : vector<8x128xf32>
    %19 = tpu.matmul %13, %12, %cst_17 {dimension_numbers = #tpu.dot_dimension_numbers<[1], [0], [0], [1], [0, 0, 1, 1], [], []>} : vector<8x32xbf16>, vector<32x128xbf16>, vector<8x128xf32> -> vector<8x128xf32>
    %20 = arith.addf %18, %19 : vector<8x128xf32>
    %21 = vector.extract_strided_slice %20 {offsets = [0, 0], sizes = [8, 32], strides = [1, 1]} : vector<8x128xf32> to vector<8x32xf32>
    %22 = math.tanh %21 : vector<8x32xf32>
    %23 = vector.extract_strided_slice %20 {offsets = [0, 32], sizes = [8, 96], strides = [1, 1]} : vector<8x128xf32> to vector<8x96xf32>
    %24 = arith.negf %23 : vector<8x96xf32>
    %25 = math.exp %24 : vector<8x96xf32>
    %cst_18 = arith.constant 1.000000e+00 : f32
    %26 = vector.broadcast %cst_18 : f32 to vector<8x96xf32>
    %27 = arith.addf %26, %25 : vector<8x96xf32>
    %28 = arith.divf %26, %27 : vector<8x96xf32>
    %29 = vector.extract_strided_slice %28 {offsets = [0, 0], sizes = [8, 32], strides = [1, 1]} : vector<8x96xf32> to vector<8x32xf32>
    %30 = vector.extract_strided_slice %28 {offsets = [0, 32], sizes = [8, 32], strides = [1, 1]} : vector<8x96xf32> to vector<8x32xf32>
    %31 = vector.extract_strided_slice %28 {offsets = [0, 64], sizes = [8, 32], strides = [1, 1]} : vector<8x96xf32> to vector<8x32xf32>
    %32 = arith.mulf %22, %29 : vector<8x32xf32>
    %33 = arith.mulf %14, %30 : vector<8x32xf32>
    %34 = arith.addf %32, %33 : vector<8x32xf32>
    %35 = math.tanh %34 : vector<8x32xf32>
    %36 = arith.mulf %35, %31 : vector<8x32xf32>
    %37 = arith.truncf %36 : vector<8x32xf32> to vector<8x32xbf16>
    %c1_i32 = arith.constant 1 : i32
    %c8_i32_19 = arith.constant 8 : i32
    %38 = arith.muli %c1_i32, %c8_i32_19 : i32
    %39 = tpu.assume_multiple %38, 8 : i32
    %40 = arith.index_cast %39 : i32 to index
    %c0_20 = arith.constant 0 : index
    %41 = vector.load %arg9[%40, %c0_20] : memref<64x128xf32, #tpu.memory_space<vmem>>, vector<8x128xf32>
    %cst_21 = arith.constant dense<0.000000e+00> : vector<8x128xf32>
    %42 = tpu.matmul %37, %12, %cst_21 {dimension_numbers = #tpu.dot_dimension_numbers<[1], [0], [0], [1], [0, 0, 1, 1], [], []>} : vector<8x32xbf16>, vector<32x128xbf16>, vector<8x128xf32> -> vector<8x128xf32>
    %43 = arith.addf %41, %42 : vector<8x128xf32>
    %44 = vector.extract_strided_slice %43 {offsets = [0, 0], sizes = [8, 32], strides = [1, 1]} : vector<8x128xf32> to vector<8x32xf32>
    %45 = math.tanh %44 : vector<8x32xf32>
    %46 = vector.extract_strided_slice %43 {offsets = [0, 32], sizes = [8, 96], strides = [1, 1]} : vector<8x128xf32> to vector<8x96xf32>
    %47 = arith.negf %46 : vector<8x96xf32>
    %48 = math.exp %47 : vector<8x96xf32>
    %cst_22 = arith.constant 1.000000e+00 : f32
    %49 = vector.broadcast %cst_22 : f32 to vector<8x96xf32>
    %50 = arith.addf %49, %48 : vector<8x96xf32>
    %51 = arith.divf %49, %50 : vector<8x96xf32>
    %52 = vector.extract_strided_slice %51 {offsets = [0, 0], sizes = [8, 32], strides = [1, 1]} : vector<8x96xf32> to vector<8x32xf32>
    %53 = vector.extract_strided_slice %51 {offsets = [0, 32], sizes = [8, 32], strides = [1, 1]} : vector<8x96xf32> to vector<8x32xf32>
    %54 = vector.extract_strided_slice %51 {offsets = [0, 64], sizes = [8, 32], strides = [1, 1]} : vector<8x96xf32> to vector<8x32xf32>
    %55 = arith.mulf %45, %52 : vector<8x32xf32>
    %56 = arith.mulf %34, %53 : vector<8x32xf32>
    %57 = arith.addf %55, %56 : vector<8x32xf32>
    %58 = math.tanh %57 : vector<8x32xf32>
    %59 = arith.mulf %58, %54 : vector<8x32xf32>
    %60 = arith.truncf %59 : vector<8x32xf32> to vector<8x32xbf16>
    %c2_i32 = arith.constant 2 : i32
    %c8_i32_23 = arith.constant 8 : i32
    %61 = arith.muli %c2_i32, %c8_i32_23 : i32
    %62 = tpu.assume_multiple %61, 8 : i32
    %63 = arith.index_cast %62 : i32 to index
    %c0_24 = arith.constant 0 : index
    %64 = vector.load %arg9[%63, %c0_24] : memref<64x128xf32, #tpu.memory_space<vmem>>, vector<8x128xf32>
    %cst_25 = arith.constant dense<0.000000e+00> : vector<8x128xf32>
    %65 = tpu.matmul %60, %12, %cst_25 {dimension_numbers = #tpu.dot_dimension_numbers<[1], [0], [0], [1], [0, 0, 1, 1], [], []>} : vector<8x32xbf16>, vector<32x128xbf16>, vector<8x128xf32> -> vector<8x128xf32>
    %66 = arith.addf %64, %65 : vector<8x128xf32>
    %67 = vector.extract_strided_slice %66 {offsets = [0, 0], sizes = [8, 32], strides = [1, 1]} : vector<8x128xf32> to vector<8x32xf32>
    %68 = math.tanh %67 : vector<8x32xf32>
    %69 = vector.extract_strided_slice %66 {offsets = [0, 32], sizes = [8, 96], strides = [1, 1]} : vector<8x128xf32> to vector<8x96xf32>
    %70 = arith.negf %69 : vector<8x96xf32>
    %71 = math.exp %70 : vector<8x96xf32>
    %cst_26 = arith.constant 1.000000e+00 : f32
    %72 = vector.broadcast %cst_26 : f32 to vector<8x96xf32>
    %73 = arith.addf %72, %71 : vector<8x96xf32>
    %74 = arith.divf %72, %73 : vector<8x96xf32>
    %75 = vector.extract_strided_slice %74 {offsets = [0, 0], sizes = [8, 32], strides = [1, 1]} : vector<8x96xf32> to vector<8x32xf32>
    %76 = vector.extract_strided_slice %74 {offsets = [0, 32], sizes = [8, 32], strides = [1, 1]} : vector<8x96xf32> to vector<8x32xf32>
    %77 = vector.extract_strided_slice %74 {offsets = [0, 64], sizes = [8, 32], strides = [1, 1]} : vector<8x96xf32> to vector<8x32xf32>
    %78 = arith.mulf %68, %75 : vector<8x32xf32>
    %79 = arith.mulf %57, %76 : vector<8x32xf32>
    %80 = arith.addf %78, %79 : vector<8x32xf32>
    %81 = math.tanh %80 : vector<8x32xf32>
    %82 = arith.mulf %81, %77 : vector<8x32xf32>
    %83 = arith.truncf %82 : vector<8x32xf32> to vector<8x32xbf16>
    %c3_i32 = arith.constant 3 : i32
    %c8_i32_27 = arith.constant 8 : i32
    %84 = arith.muli %c3_i32, %c8_i32_27 : i32
    %85 = tpu.assume_multiple %84, 8 : i32
    %86 = arith.index_cast %85 : i32 to index
    %c0_28 = arith.constant 0 : index
    %87 = vector.load %arg9[%86, %c0_28] : memref<64x128xf32, #tpu.memory_space<vmem>>, vector<8x128xf32>
    %cst_29 = arith.constant dense<0.000000e+00> : vector<8x128xf32>
    %88 = tpu.matmul %83, %12, %cst_29 {dimension_numbers = #tpu.dot_dimension_numbers<[1], [0], [0], [1], [0, 0, 1, 1], [], []>} : vector<8x32xbf16>, vector<32x128xbf16>, vector<8x128xf32> -> vector<8x128xf32>
    %89 = arith.addf %87, %88 : vector<8x128xf32>
    %90 = vector.extract_strided_slice %89 {offsets = [0, 0], sizes = [8, 32], strides = [1, 1]} : vector<8x128xf32> to vector<8x32xf32>
    %91 = math.tanh %90 : vector<8x32xf32>
    %92 = vector.extract_strided_slice %89 {offsets = [0, 32], sizes = [8, 96], strides = [1, 1]} : vector<8x128xf32> to vector<8x96xf32>
    %93 = arith.negf %92 : vector<8x96xf32>
    %94 = math.exp %93 : vector<8x96xf32>
    %cst_30 = arith.constant 1.000000e+00 : f32
    %95 = vector.broadcast %cst_30 : f32 to vector<8x96xf32>
    %96 = arith.addf %95, %94 : vector<8x96xf32>
    %97 = arith.divf %95, %96 : vector<8x96xf32>
    %98 = vector.extract_strided_slice %97 {offsets = [0, 0], sizes = [8, 32], strides = [1, 1]} : vector<8x96xf32> to vector<8x32xf32>
    %99 = vector.extract_strided_slice %97 {offsets = [0, 32], sizes = [8, 32], strides = [1, 1]} : vector<8x96xf32> to vector<8x32xf32>
    %100 = vector.extract_strided_slice %97 {offsets = [0, 64], sizes = [8, 32], strides = [1, 1]} : vector<8x96xf32> to vector<8x32xf32>
    %101 = arith.mulf %91, %98 : vector<8x32xf32>
    %102 = arith.mulf %80, %99 : vector<8x32xf32>
    %103 = arith.addf %101, %102 : vector<8x32xf32>
    %104 = math.tanh %103 : vector<8x32xf32>
    %105 = arith.mulf %104, %100 : vector<8x32xf32>
    %106 = arith.truncf %105 : vector<8x32xf32> to vector<8x32xbf16>
    %c4_i32 = arith.constant 4 : i32
    %c8_i32_31 = arith.constant 8 : i32
    %107 = arith.muli %c4_i32, %c8_i32_31 : i32
    %108 = tpu.assume_multiple %107, 8 : i32
    %109 = arith.index_cast %108 : i32 to index
    %c0_32 = arith.constant 0 : index
    %110 = vector.load %arg9[%109, %c0_32] : memref<64x128xf32, #tpu.memory_space<vmem>>, vector<8x128xf32>
    %cst_33 = arith.constant dense<0.000000e+00> : vector<8x128xf32>
    %111 = tpu.matmul %106, %12, %cst_33 {dimension_numbers = #tpu.dot_dimension_numbers<[1], [0], [0], [1], [0, 0, 1, 1], [], []>} : vector<8x32xbf16>, vector<32x128xbf16>, vector<8x128xf32> -> vector<8x128xf32>
    %112 = arith.addf %110, %111 : vector<8x128xf32>
    %113 = vector.extract_strided_slice %112 {offsets = [0, 0], sizes = [8, 32], strides = [1, 1]} : vector<8x128xf32> to vector<8x32xf32>
    %114 = math.tanh %113 : vector<8x32xf32>
    %115 = vector.extract_strided_slice %112 {offsets = [0, 32], sizes = [8, 96], strides = [1, 1]} : vector<8x128xf32> to vector<8x96xf32>
    %116 = arith.negf %115 : vector<8x96xf32>
    %117 = math.exp %116 : vector<8x96xf32>
    %cst_34 = arith.constant 1.000000e+00 : f32
    %118 = vector.broadcast %cst_34 : f32 to vector<8x96xf32>
    %119 = arith.addf %118, %117 : vector<8x96xf32>
    %120 = arith.divf %118, %119 : vector<8x96xf32>
    %121 = vector.extract_strided_slice %120 {offsets = [0, 0], sizes = [8, 32], strides = [1, 1]} : vector<8x96xf32> to vector<8x32xf32>
    %122 = vector.extract_strided_slice %120 {offsets = [0, 32], sizes = [8, 32], strides = [1, 1]} : vector<8x96xf32> to vector<8x32xf32>
    %123 = vector.extract_strided_slice %120 {offsets = [0, 64], sizes = [8, 32], strides = [1, 1]} : vector<8x96xf32> to vector<8x32xf32>
    %124 = arith.mulf %114, %121 : vector<8x32xf32>
    %125 = arith.mulf %103, %122 : vector<8x32xf32>
    %126 = arith.addf %124, %125 : vector<8x32xf32>
    %127 = math.tanh %126 : vector<8x32xf32>
    %128 = arith.mulf %127, %123 : vector<8x32xf32>
    %129 = arith.truncf %128 : vector<8x32xf32> to vector<8x32xbf16>
    %c5_i32 = arith.constant 5 : i32
    %c8_i32_35 = arith.constant 8 : i32
    %130 = arith.muli %c5_i32, %c8_i32_35 : i32
    %131 = tpu.assume_multiple %130, 8 : i32
    %132 = arith.index_cast %131 : i32 to index
    %c0_36 = arith.constant 0 : index
    %133 = vector.load %arg9[%132, %c0_36] : memref<64x128xf32, #tpu.memory_space<vmem>>, vector<8x128xf32>
    %cst_37 = arith.constant dense<0.000000e+00> : vector<8x128xf32>
    %134 = tpu.matmul %129, %12, %cst_37 {dimension_numbers = #tpu.dot_dimension_numbers<[1], [0], [0], [1], [0, 0, 1, 1], [], []>} : vector<8x32xbf16>, vector<32x128xbf16>, vector<8x128xf32> -> vector<8x128xf32>
    %135 = arith.addf %133, %134 : vector<8x128xf32>
    %136 = vector.extract_strided_slice %135 {offsets = [0, 0], sizes = [8, 32], strides = [1, 1]} : vector<8x128xf32> to vector<8x32xf32>
    %137 = math.tanh %136 : vector<8x32xf32>
    %138 = vector.extract_strided_slice %135 {offsets = [0, 32], sizes = [8, 96], strides = [1, 1]} : vector<8x128xf32> to vector<8x96xf32>
    %139 = arith.negf %138 : vector<8x96xf32>
    %140 = math.exp %139 : vector<8x96xf32>
    %cst_38 = arith.constant 1.000000e+00 : f32
    %141 = vector.broadcast %cst_38 : f32 to vector<8x96xf32>
    %142 = arith.addf %141, %140 : vector<8x96xf32>
    %143 = arith.divf %141, %142 : vector<8x96xf32>
    %144 = vector.extract_strided_slice %143 {offsets = [0, 0], sizes = [8, 32], strides = [1, 1]} : vector<8x96xf32> to vector<8x32xf32>
    %145 = vector.extract_strided_slice %143 {offsets = [0, 32], sizes = [8, 32], strides = [1, 1]} : vector<8x96xf32> to vector<8x32xf32>
    %146 = vector.extract_strided_slice %143 {offsets = [0, 64], sizes = [8, 32], strides = [1, 1]} : vector<8x96xf32> to vector<8x32xf32>
    %147 = arith.mulf %137, %144 : vector<8x32xf32>
    %148 = arith.mulf %126, %145 : vector<8x32xf32>
    %149 = arith.addf %147, %148 : vector<8x32xf32>
    %150 = math.tanh %149 : vector<8x32xf32>
    %151 = arith.mulf %150, %146 : vector<8x32xf32>
    %152 = arith.truncf %151 : vector<8x32xf32> to vector<8x32xbf16>
    %c6_i32 = arith.constant 6 : i32
    %c8_i32_39 = arith.constant 8 : i32
    %153 = arith.muli %c6_i32, %c8_i32_39 : i32
    %154 = tpu.assume_multiple %153, 8 : i32
    %155 = arith.index_cast %154 : i32 to index
    %c0_40 = arith.constant 0 : index
    %156 = vector.load %arg9[%155, %c0_40] : memref<64x128xf32, #tpu.memory_space<vmem>>, vector<8x128xf32>
    %cst_41 = arith.constant dense<0.000000e+00> : vector<8x128xf32>
    %157 = tpu.matmul %152, %12, %cst_41 {dimension_numbers = #tpu.dot_dimension_numbers<[1], [0], [0], [1], [0, 0, 1, 1], [], []>} : vector<8x32xbf16>, vector<32x128xbf16>, vector<8x128xf32> -> vector<8x128xf32>
    %158 = arith.addf %156, %157 : vector<8x128xf32>
    %159 = vector.extract_strided_slice %158 {offsets = [0, 0], sizes = [8, 32], strides = [1, 1]} : vector<8x128xf32> to vector<8x32xf32>
    %160 = math.tanh %159 : vector<8x32xf32>
    %161 = vector.extract_strided_slice %158 {offsets = [0, 32], sizes = [8, 96], strides = [1, 1]} : vector<8x128xf32> to vector<8x96xf32>
    %162 = arith.negf %161 : vector<8x96xf32>
    %163 = math.exp %162 : vector<8x96xf32>
    %cst_42 = arith.constant 1.000000e+00 : f32
    %164 = vector.broadcast %cst_42 : f32 to vector<8x96xf32>
    %165 = arith.addf %164, %163 : vector<8x96xf32>
    %166 = arith.divf %164, %165 : vector<8x96xf32>
    %167 = vector.extract_strided_slice %166 {offsets = [0, 0], sizes = [8, 32], strides = [1, 1]} : vector<8x96xf32> to vector<8x32xf32>
    %168 = vector.extract_strided_slice %166 {offsets = [0, 32], sizes = [8, 32], strides = [1, 1]} : vector<8x96xf32> to vector<8x32xf32>
    %169 = vector.extract_strided_slice %166 {offsets = [0, 64], sizes = [8, 32], strides = [1, 1]} : vector<8x96xf32> to vector<8x32xf32>
    %170 = arith.mulf %160, %167 : vector<8x32xf32>
    %171 = arith.mulf %149, %168 : vector<8x32xf32>
    %172 = arith.addf %170, %171 : vector<8x32xf32>
    %173 = math.tanh %172 : vector<8x32xf32>
    %174 = arith.mulf %173, %169 : vector<8x32xf32>
    %175 = arith.truncf %174 : vector<8x32xf32> to vector<8x32xbf16>
    %c7_i32 = arith.constant 7 : i32
    %c8_i32_43 = arith.constant 8 : i32
    %176 = arith.muli %c7_i32, %c8_i32_43 : i32
    %177 = tpu.assume_multiple %176, 8 : i32
    %178 = arith.index_cast %177 : i32 to index
    %c0_44 = arith.constant 0 : index
    %179 = vector.load %arg9[%178, %c0_44] : memref<64x128xf32, #tpu.memory_space<vmem>>, vector<8x128xf32>
    %cst_45 = arith.constant dense<0.000000e+00> : vector<8x128xf32>
    %180 = tpu.matmul %175, %12, %cst_45 {dimension_numbers = #tpu.dot_dimension_numbers<[1], [0], [0], [1], [0, 0, 1, 1], [], []>} : vector<8x32xbf16>, vector<32x128xbf16>, vector<8x128xf32> -> vector<8x128xf32>
    %181 = arith.addf %179, %180 : vector<8x128xf32>
    %182 = vector.extract_strided_slice %181 {offsets = [0, 0], sizes = [8, 32], strides = [1, 1]} : vector<8x128xf32> to vector<8x32xf32>
    %183 = math.tanh %182 : vector<8x32xf32>
    %184 = vector.extract_strided_slice %181 {offsets = [0, 32], sizes = [8, 96], strides = [1, 1]} : vector<8x128xf32> to vector<8x96xf32>
    %185 = arith.negf %184 : vector<8x96xf32>
    %186 = math.exp %185 : vector<8x96xf32>
    %cst_46 = arith.constant 1.000000e+00 : f32
    %187 = vector.broadcast %cst_46 : f32 to vector<8x96xf32>
    %188 = arith.addf %187, %186 : vector<8x96xf32>
    %189 = arith.divf %187, %188 : vector<8x96xf32>
    %190 = vector.extract_strided_slice %189 {offsets = [0, 0], sizes = [8, 32], strides = [1, 1]} : vector<8x96xf32> to vector<8x32xf32>
    %191 = vector.extract_strided_slice %189 {offsets = [0, 32], sizes = [8, 32], strides = [1, 1]} : vector<8x96xf32> to vector<8x32xf32>
    %192 = vector.extract_strided_slice %189 {offsets = [0, 64], sizes = [8, 32], strides = [1, 1]} : vector<8x96xf32> to vector<8x32xf32>
    %193 = arith.mulf %183, %190 : vector<8x32xf32>
    %194 = arith.mulf %172, %191 : vector<8x32xf32>
    %195 = arith.addf %193, %194 : vector<8x32xf32>
    %196 = math.tanh %195 : vector<8x32xf32>
    %197 = arith.mulf %196, %192 : vector<8x32xf32>
    %198 = arith.truncf %197 : vector<8x32xf32> to vector<8x32xbf16>
    %c8_i32_47 = arith.constant 8 : i32
    %c0_48 = arith.constant 0 : index
    %c0_49 = arith.constant 0 : index
    %199 = vector.load %arg7[%c0_48, %c0_49] : memref<8x32xbf16, #tpu.memory_space<vmem>>, vector<8x32xbf16>
    tpu.vector_store %arg7[%c0_48, %c0_49], %198 {strides = array<i32>} : memref<8x32xbf16, #tpu.memory_space<vmem>>, vector<8x32xbf16>,
    %c0_50 = arith.constant 0 : index
    %c0_51 = arith.constant 0 : index
    %200 = vector.load %arg8[%c0_50, %c0_51] : memref<8x32xf32, #tpu.memory_space<vmem>>, vector<8x32xf32>
    tpu.vector_store %arg8[%c0_50, %c0_51], %195 {strides = array<i32>} : memref<8x32xf32, #tpu.memory_space<vmem>>, vector<8x32xf32>,
    %c0_i32_52 = arith.constant 0 : i32
    %201 = arith.cmpi eq, %arg1, %c0_i32_52 : i32
    %202 = arith.extui %201 : i1 to i32
    %c0_i32_53 = arith.constant 0 : i32
    %203 = arith.cmpi ne, %202, %c0_i32_53 : i32
    scf.if %203 {
      %204 = arith.extf %198 : vector<8x32xbf16> to vector<8x32xf32>
      %c0_54 = arith.constant 0 : index
      %c0_55 = arith.constant 0 : index
      %205 = vector.load %arg6[%c0_54, %c0_55] : memref<8x32xf32, #tpu.memory_space<vmem>>, vector<8x32xf32>
      tpu.vector_store %arg6[%c0_54, %c0_55], %204 {strides = array<i32>} : memref<8x32xf32, #tpu.memory_space<vmem>>, vector<8x32xf32>,
    } else {
    }
    return
  }
  func.func @transform_0(%arg0: i32, %arg1: i32) -> (i32, i32, i32) {
    %c0_i32 = arith.constant 0 : i32
    %c0_i32_0 = arith.constant 0 : i32
    return %arg1, %arg0, %c0_i32 : i32, i32, i32
  }
  func.func @transform_1(%arg0: i32, %arg1: i32) -> (i32, i32) {
    %c0_i32 = arith.constant 0 : i32
    %c0_i32_0 = arith.constant 0 : i32
    %c0_i32_1 = arith.constant 0 : i32
    return %c0_i32, %c0_i32_0 : i32, i32
  }
  func.func @transform_2(%arg0: i32, %arg1: i32) -> (i32, i32) {
    %c0_i32 = arith.constant 0 : i32
    %c0_i32_0 = arith.constant 0 : i32
    %c0_i32_1 = arith.constant 0 : i32
    return %c0_i32, %c0_i32_0 : i32, i32
  }
  func.func @transform_3(%arg0: i32, %arg1: i32) -> (i32, i32) {
    %c0_i32 = arith.constant 0 : i32
    %c0_i32_0 = arith.constant 0 : i32
    %c0_i32_1 = arith.constant 0 : i32
    return %c0_i32, %c0_i32_0 : i32, i32
  }
  func.func @transform_4(%arg0: i32, %arg1: i32) -> (i32, i32) {
    %c0_i32 = arith.constant 0 : i32
    %c0_i32_0 = arith.constant 0 : i32
    return %arg0, %c0_i32 : i32, i32
  }
}

module attributes {stable_mosaic.version = 11 : i64} {
  func.func @kernel(%arg0: i32, %arg1: i32, %arg2: memref<8x8x4xf32, #tpu.memory_space<vmem>>, %arg3: memref<4x128xbf16, #tpu.memory_space<vmem>>, %arg4: memref<32x128xbf16, #tpu.memory_space<vmem>>, %arg5: memref<1x128xf32, #tpu.memory_space<vmem>>, %arg6: memref<8x32xf32, #tpu.memory_space<vmem>>, %arg7: memref<8x32xbf16, #tpu.memory_space<vmem>>, %arg8: memref<8x32xf32, #tpu.memory_space<vmem>>, %arg9: memref<64x128xf32, #tpu.memory_space<vmem>>) attributes {dimension_semantics = [#tpu.dimension_semantics<arbitrary>, #tpu.dimension_semantics<arbitrary>], iteration_bounds = array<i64: 1, 1>, scalar_prefetch = 0 : i64, scratch_operands = 3 : i64, tpu.core_type = #tpu.core_type<tc>, window_params = [{transform_indices = @transform_0, window_bounds = array<i64: 8, 8, 4>}, {pipeline_mode = #tpu.pipeline_mode<synchronous>, transform_indices = @transform_1, window_bounds = array<i64: 4, 128>}, {pipeline_mode = #tpu.pipeline_mode<synchronous>, transform_indices = @transform_2, window_bounds = array<i64: 32, 128>}, {pipeline_mode = #tpu.pipeline_mode<synchronous>, transform_indices = @transform_3, window_bounds = array<i64: 1, 128>}, {transform_indices = @transform_4, window_bounds = array<i64: 8, 32>}]} {
    %c0_i32 = arith.constant 0 : i32
    %0 = arith.cmpi eq, %arg1, %c0_i32 : i32
    %1 = arith.extui %0 : i1 to i32
    %c0_i32_0 = arith.constant 0 : i32
    %2 = arith.cmpi ne, %1, %c0_i32_0 : i32
    scf.if %2 {
      %cst_54 = arith.constant 0.000000e+00 : bf16
      %204 = vector.broadcast %cst_54 : bf16 to vector<8x32xbf16>
      %c0_55 = arith.constant 0 : index
      %c0_56 = arith.constant 0 : index
      %205 = vector.load %arg7[%c0_55, %c0_56] : memref<8x32xbf16, #tpu.memory_space<vmem>>, vector<8x32xbf16>
      tpu.vector_store %arg7[%c0_55, %c0_56], %204 {strides = array<i32>} : memref<8x32xbf16, #tpu.memory_space<vmem>>, vector<8x32xbf16>,
      %cst_57 = arith.constant 0.000000e+00 : f32
      %206 = vector.broadcast %cst_57 : f32 to vector<8x32xf32>
      %c0_58 = arith.constant 0 : index
      %c0_59 = arith.constant 0 : index
      %207 = vector.load %arg8[%c0_58, %c0_59] : memref<8x32xf32, #tpu.memory_space<vmem>>, vector<8x32xf32>
      tpu.vector_store %arg8[%c0_58, %c0_59], %206 {strides = array<i32>} : memref<8x32xf32, #tpu.memory_space<vmem>>, vector<8x32xf32>,
    } else {
    }
    %c0 = arith.constant 0 : index
    %c0_1 = arith.constant 0 : index
    %c0_2 = arith.constant 0 : index
    %3 = vector.load %arg2[%c0, %c0_1, %c0_2] : memref<8x8x4xf32, #tpu.memory_space<vmem>>, vector<8x8x4xf32>
    %4 = vector.shape_cast %3 : vector<8x8x4xf32> to vector<64x4xf32>
    %5 = arith.truncf %4 : vector<64x4xf32> to vector<64x4xbf16>
    %c0_3 = arith.constant 0 : index
    %c0_4 = arith.constant 0 : index
    %6 = vector.load %arg3[%c0_3, %c0_4] : memref<4x128xbf16, #tpu.memory_space<vmem>>, vector<4x128xbf16>
    %cst = arith.constant dense<0.000000e+00> : vector<64x128xf32>
    %7 = tpu.matmul %5, %6, %cst {dimension_numbers = #tpu.dot_dimension_numbers<[1], [0], [0], [1], [0, 0, 1, 1], [], []>} : vector<64x4xbf16>, vector<4x128xbf16>, vector<64x128xf32> -> vector<64x128xf32>
    %c0_5 = arith.constant 0 : index
    %c0_6 = arith.constant 0 : index
    %8 = vector.load %arg5[%c0_5, %c0_6] : memref<1x128xf32, #tpu.memory_space<vmem>>, vector<1x128xf32>
    %9 = vector.broadcast %8 : vector<1x128xf32> to vector<64x128xf32>
    %10 = arith.addf %7, %9 : vector<64x128xf32>
    %c0_7 = arith.constant 0 : index
    %c0_8 = arith.constant 0 : index
    %11 = vector.load %arg9[%c0_7, %c0_8] : memref<64x128xf32, #tpu.memory_space<vmem>>, vector<64x128xf32>
    tpu.vector_store %arg9[%c0_7, %c0_8], %10 {strides = array<i32>} : memref<64x128xf32, #tpu.memory_space<vmem>>, vector<64x128xf32>,
    %c0_9 = arith.constant 0 : index
    %c0_10 = arith.constant 0 : index
    %12 = vector.load %arg4[%c0_9, %c0_10] : memref<32x128xbf16, #tpu.memory_space<vmem>>, vector<32x128xbf16>
    %c0_11 = arith.constant 0 : index
    %c0_12 = arith.constant 0 : index
    %13 = vector.load %arg7[%c0_11, %c0_12] : memref<8x32xbf16, #tpu.memory_space<vmem>>, vector<8x32xbf16>
    %c0_13 = arith.constant 0 : index
    %c0_14 = arith.constant 0 : index
    %14 = vector.load %arg8[%c0_13, %c0_14] : memref<8x32xf32, #tpu.memory_space<vmem>>, vector<8x32xf32>
    %c0_i32_15 = arith.constant 0 : i32
    %c8_i32 = arith.constant 8 : i32
    %15 = arith.muli %c0_i32_15, %c8_i32 : i32
    %16 = tpu.assume_multiple %15, 8 : i32
    %17 = arith.index_cast %16 : i32 to index
    %c0_16 = arith.constant 0 : index
    %18 = vector.load %arg9[%17, %c0_16] : memref<64x128xf32, #tpu.memory_space<vmem>>, vector<8x128xf32>
    %cst_17 = arith.constant dense<0.000000e+00> : vector<8x128xf32>
    %19 = tpu.matmul %13, %12, %cst_17 {dimension_numbers = #tpu.dot_dimension_numbers<[1], [0], [0], [1], [0, 0, 1, 1], [], []>} : vector<8x32xbf16>, vector<32x128xbf16>, vector<8x128xf32> -> vector<8x128xf32>
    %20 = arith.addf %18, %19 : vector<8x128xf32>
    %21 = vector.extract_strided_slice %20 {offsets = [0, 0], sizes = [8, 32], strides = [1, 1]} : vector<8x128xf32> to vector<8x32xf32>
    %22 = math.tanh %21 : vector<8x32xf32>
    %23 = vector.extract_strided_slice %20 {offsets = [0, 32], sizes = [8, 96], strides = [1, 1]} : vector<8x128xf32> to vector<8x96xf32>
    %24 = arith.negf %23 : vector<8x96xf32>
    %25 = math.exp %24 : vector<8x96xf32>
    %cst_18 = arith.constant 1.000000e+00 : f32
    %26 = vector.broadcast %cst_18 : f32 to vector<8x96xf32>
    %27 = arith.addf %26, %25 : vector<8x96xf32>
    %28 = arith.divf %26, %27 : vector<8x96xf32>
    %29 = vector.extract_strided_slice %28 {offsets = [0, 0], sizes = [8, 32], strides = [1, 1]} : vector<8x96xf32> to vector<8x32xf32>
    %30 = vector.extract_strided_slice %28 {offsets = [0, 32], sizes = [8, 32], strides = [1, 1]} : vector<8x96xf32> to vector<8x32xf32>
    %31 = vector.extract_strided_slice %28 {offsets = [0, 64], sizes = [8, 32], strides = [1, 1]} : vector<8x96xf32> to vector<8x32xf32>
    %32 = arith.mulf %22, %29 : vector<8x32xf32>
    %33 = arith.mulf %14, %30 : vector<8x32xf32>
    %34 = arith.addf %32, %33 : vector<8x32xf32>
    %35 = math.tanh %34 : vector<8x32xf32>
    %36 = arith.mulf %35, %31 : vector<8x32xf32>
    %37 = arith.truncf %36 : vector<8x32xf32> to vector<8x32xbf16>
    %c1_i32 = arith.constant 1 : i32
    %c8_i32_19 = arith.constant 8 : i32
    %38 = arith.muli %c1_i32, %c8_i32_19 : i32
    %39 = tpu.assume_multiple %38, 8 : i32
    %40 = arith.index_cast %39 : i32 to index
    %c0_20 = arith.constant 0 : index
    %41 = vector.load %arg9[%40, %c0_20] : memref<64x128xf32, #tpu.memory_space<vmem>>, vector<8x128xf32>
    %cst_21 = arith.constant dense<0.000000e+00> : vector<8x128xf32>
    %42 = tpu.matmul %37, %12, %cst_21 {dimension_numbers = #tpu.dot_dimension_numbers<[1], [0], [0], [1], [0, 0, 1, 1], [], []>} : vector<8x32xbf16>, vector<32x128xbf16>, vector<8x128xf32> -> vector<8x128xf32>
    %43 = arith.addf %41, %42 : vector<8x128xf32>
    %44 = vector.extract_strided_slice %43 {offsets = [0, 0], sizes = [8, 32], strides = [1, 1]} : vector<8x128xf32> to vector<8x32xf32>
    %45 = math.tanh %44 : vector<8x32xf32>
    %46 = vector.extract_strided_slice %43 {offsets = [0, 32], sizes = [8, 96], strides = [1, 1]} : vector<8x128xf32> to vector<8x96xf32>
    %47 = arith.negf %46 : vector<8x96xf32>
    %48 = math.exp %47 : vector<8x96xf32>
    %cst_22 = arith.constant 1.000000e+00 : f32
    %49 = vector.broadcast %cst_22 : f32 to vector<8x96xf32>
    %50 = arith.addf %49, %48 : vector<8x96xf32>
    %51 = arith.divf %49, %50 : vector<8x96xf32>
    %52 = vector.extract_strided_slice %51 {offsets = [0, 0], sizes = [8, 32], strides = [1, 1]} : vector<8x96xf32> to vector<8x32xf32>
    %53 = vector.extract_strided_slice %51 {offsets = [0, 32], sizes = [8, 32], strides = [1, 1]} : vector<8x96xf32> to vector<8x32xf32>
    %54 = vector.extract_strided_slice %51 {offsets = [0, 64], sizes = [8, 32], strides = [1, 1]} : vector<8x96xf32> to vector<8x32xf32>
    %55 = arith.mulf %45, %52 : vector<8x32xf32>
    %56 = arith.mulf %34, %53 : vector<8x32xf32>
    %57 = arith.addf %55, %56 : vector<8x32xf32>
    %58 = math.tanh %57 : vector<8x32xf32>
    %59 = arith.mulf %58, %54 : vector<8x32xf32>
    %60 = arith.truncf %59 : vector<8x32xf32> to vector<8x32xbf16>
    %c2_i32 = arith.constant 2 : i32
    %c8_i32_23 = arith.constant 8 : i32
    %61 = arith.muli %c2_i32, %c8_i32_23 : i32
    %62 = tpu.assume_multiple %61, 8 : i32
    %63 = arith.index_cast %62 : i32 to index
    %c0_24 = arith.constant 0 : index
    %64 = vector.load %arg9[%63, %c0_24] : memref<64x128xf32, #tpu.memory_space<vmem>>, vector<8x128xf32>
    %cst_25 = arith.constant dense<0.000000e+00> : vector<8x128xf32>
    %65 = tpu.matmul %60, %12, %cst_25 {dimension_numbers = #tpu.dot_dimension_numbers<[1], [0], [0], [1], [0, 0, 1, 1], [], []>} : vector<8x32xbf16>, vector<32x128xbf16>, vector<8x128xf32> -> vector<8x128xf32>
    %66 = arith.addf %64, %65 : vector<8x128xf32>
    %67 = vector.extract_strided_slice %66 {offsets = [0, 0], sizes = [8, 32], strides = [1, 1]} : vector<8x128xf32> to vector<8x32xf32>
    %68 = math.tanh %67 : vector<8x32xf32>
    %69 = vector.extract_strided_slice %66 {offsets = [0, 32], sizes = [8, 96], strides = [1, 1]} : vector<8x128xf32> to vector<8x96xf32>
    %70 = arith.negf %69 : vector<8x96xf32>
    %71 = math.exp %70 : vector<8x96xf32>
    %cst_26 = arith.constant 1.000000e+00 : f32
    %72 = vector.broadcast %cst_26 : f32 to vector<8x96xf32>
    %73 = arith.addf %72, %71 : vector<8x96xf32>
    %74 = arith.divf %72, %73 : vector<8x96xf32>
    %75 = vector.extract_strided_slice %74 {offsets = [0, 0], sizes = [8, 32], strides = [1, 1]} : vector<8x96xf32> to vector<8x32xf32>
    %76 = vector.extract_strided_slice %74 {offsets = [0, 32], sizes = [8, 32], strides = [1, 1]} : vector<8x96xf32> to vector<8x32xf32>
    %77 = vector.extract_strided_slice %74 {offsets = [0, 64], sizes = [8, 32], strides = [1, 1]} : vector<8x96xf32> to vector<8x32xf32>
    %78 = arith.mulf %68, %75 : vector<8x32xf32>
    %79 = arith.mulf %57, %76 : vector<8x32xf32>
    %80 = arith.addf %78, %79 : vector<8x32xf32>
    %81 = math.tanh %80 : vector<8x32xf32>
    %82 = arith.mulf %81, %77 : vector<8x32xf32>
    %83 = arith.truncf %82 : vector<8x32xf32> to vector<8x32xbf16>
    %c3_i32 = arith.constant 3 : i32
    %c8_i32_27 = arith.constant 8 : i32
    %84 = arith.muli %c3_i32, %c8_i32_27 : i32
    %85 = tpu.assume_multiple %84, 8 : i32
    %86 = arith.index_cast %85 : i32 to index
    %c0_28 = arith.constant 0 : index
    %87 = vector.load %arg9[%86, %c0_28] : memref<64x128xf32, #tpu.memory_space<vmem>>, vector<8x128xf32>
    %cst_29 = arith.constant dense<0.000000e+00> : vector<8x128xf32>
    %88 = tpu.matmul %83, %12, %cst_29 {dimension_numbers = #tpu.dot_dimension_numbers<[1], [0], [0], [1], [0, 0, 1, 1], [], []>} : vector<8x32xbf16>, vector<32x128xbf16>, vector<8x128xf32> -> vector<8x128xf32>
    %89 = arith.addf %87, %88 : vector<8x128xf32>
    %90 = vector.extract_strided_slice %89 {offsets = [0, 0], sizes = [8, 32], strides = [1, 1]} : vector<8x128xf32> to vector<8x32xf32>
    %91 = math.tanh %90 : vector<8x32xf32>
    %92 = vector.extract_strided_slice %89 {offsets = [0, 32], sizes = [8, 96], strides = [1, 1]} : vector<8x128xf32> to vector<8x96xf32>
    %93 = arith.negf %92 : vector<8x96xf32>
    %94 = math.exp %93 : vector<8x96xf32>
    %cst_30 = arith.constant 1.000000e+00 : f32
    %95 = vector.broadcast %cst_30 : f32 to vector<8x96xf32>
    %96 = arith.addf %95, %94 : vector<8x96xf32>
    %97 = arith.divf %95, %96 : vector<8x96xf32>
    %98 = vector.extract_strided_slice %97 {offsets = [0, 0], sizes = [8, 32], strides = [1, 1]} : vector<8x96xf32> to vector<8x32xf32>
    %99 = vector.extract_strided_slice %97 {offsets = [0, 32], sizes = [8, 32], strides = [1, 1]} : vector<8x96xf32> to vector<8x32xf32>
    %100 = vector.extract_strided_slice %97 {offsets = [0, 64], sizes = [8, 32], strides = [1, 1]} : vector<8x96xf32> to vector<8x32xf32>
    %101 = arith.mulf %91, %98 : vector<8x32xf32>
    %102 = arith.mulf %80, %99 : vector<8x32xf32>
    %103 = arith.addf %101, %102 : vector<8x32xf32>
    %104 = math.tanh %103 : vector<8x32xf32>
    %105 = arith.mulf %104, %100 : vector<8x32xf32>
    %106 = arith.truncf %105 : vector<8x32xf32> to vector<8x32xbf16>
    %c4_i32 = arith.constant 4 : i32
    %c8_i32_31 = arith.constant 8 : i32
    %107 = arith.muli %c4_i32, %c8_i32_31 : i32
    %108 = tpu.assume_multiple %107, 8 : i32
    %109 = arith.index_cast %108 : i32 to index
    %c0_32 = arith.constant 0 : index
    %110 = vector.load %arg9[%109, %c0_32] : memref<64x128xf32, #tpu.memory_space<vmem>>, vector<8x128xf32>
    %cst_33 = arith.constant dense<0.000000e+00> : vector<8x128xf32>
    %111 = tpu.matmul %106, %12, %cst_33 {dimension_numbers = #tpu.dot_dimension_numbers<[1], [0], [0], [1], [0, 0, 1, 1], [], []>} : vector<8x32xbf16>, vector<32x128xbf16>, vector<8x128xf32> -> vector<8x128xf32>
    %112 = arith.addf %110, %111 : vector<8x128xf32>
    %113 = vector.extract_strided_slice %112 {offsets = [0, 0], sizes = [8, 32], strides = [1, 1]} : vector<8x128xf32> to vector<8x32xf32>
    %114 = math.tanh %113 : vector<8x32xf32>
    %115 = vector.extract_strided_slice %112 {offsets = [0, 32], sizes = [8, 96], strides = [1, 1]} : vector<8x128xf32> to vector<8x96xf32>
    %116 = arith.negf %115 : vector<8x96xf32>
    %117 = math.exp %116 : vector<8x96xf32>
    %cst_34 = arith.constant 1.000000e+00 : f32
    %118 = vector.broadcast %cst_34 : f32 to vector<8x96xf32>
    %119 = arith.addf %118, %117 : vector<8x96xf32>
    %120 = arith.divf %118, %119 : vector<8x96xf32>
    %121 = vector.extract_strided_slice %120 {offsets = [0, 0], sizes = [8, 32], strides = [1, 1]} : vector<8x96xf32> to vector<8x32xf32>
    %122 = vector.extract_strided_slice %120 {offsets = [0, 32], sizes = [8, 32], strides = [1, 1]} : vector<8x96xf32> to vector<8x32xf32>
    %123 = vector.extract_strided_slice %120 {offsets = [0, 64], sizes = [8, 32], strides = [1, 1]} : vector<8x96xf32> to vector<8x32xf32>
    %124 = arith.mulf %114, %121 : vector<8x32xf32>
    %125 = arith.mulf %103, %122 : vector<8x32xf32>
    %126 = arith.addf %124, %125 : vector<8x32xf32>
    %127 = math.tanh %126 : vector<8x32xf32>
    %128 = arith.mulf %127, %123 : vector<8x32xf32>
    %129 = arith.truncf %128 : vector<8x32xf32> to vector<8x32xbf16>
    %c5_i32 = arith.constant 5 : i32
    %c8_i32_35 = arith.constant 8 : i32
    %130 = arith.muli %c5_i32, %c8_i32_35 : i32
    %131 = tpu.assume_multiple %130, 8 : i32
    %132 = arith.index_cast %131 : i32 to index
    %c0_36 = arith.constant 0 : index
    %133 = vector.load %arg9[%132, %c0_36] : memref<64x128xf32, #tpu.memory_space<vmem>>, vector<8x128xf32>
    %cst_37 = arith.constant dense<0.000000e+00> : vector<8x128xf32>
    %134 = tpu.matmul %129, %12, %cst_37 {dimension_numbers = #tpu.dot_dimension_numbers<[1], [0], [0], [1], [0, 0, 1, 1], [], []>} : vector<8x32xbf16>, vector<32x128xbf16>, vector<8x128xf32> -> vector<8x128xf32>
    %135 = arith.addf %133, %134 : vector<8x128xf32>
    %136 = vector.extract_strided_slice %135 {offsets = [0, 0], sizes = [8, 32], strides = [1, 1]} : vector<8x128xf32> to vector<8x32xf32>
    %137 = math.tanh %136 : vector<8x32xf32>
    %138 = vector.extract_strided_slice %135 {offsets = [0, 32], sizes = [8, 96], strides = [1, 1]} : vector<8x128xf32> to vector<8x96xf32>
    %139 = arith.negf %138 : vector<8x96xf32>
    %140 = math.exp %139 : vector<8x96xf32>
    %cst_38 = arith.constant 1.000000e+00 : f32
    %141 = vector.broadcast %cst_38 : f32 to vector<8x96xf32>
    %142 = arith.addf %141, %140 : vector<8x96xf32>
    %143 = arith.divf %141, %142 : vector<8x96xf32>
    %144 = vector.extract_strided_slice %143 {offsets = [0, 0], sizes = [8, 32], strides = [1, 1]} : vector<8x96xf32> to vector<8x32xf32>
    %145 = vector.extract_strided_slice %143 {offsets = [0, 32], sizes = [8, 32], strides = [1, 1]} : vector<8x96xf32> to vector<8x32xf32>
    %146 = vector.extract_strided_slice %143 {offsets = [0, 64], sizes = [8, 32], strides = [1, 1]} : vector<8x96xf32> to vector<8x32xf32>
    %147 = arith.mulf %137, %144 : vector<8x32xf32>
    %148 = arith.mulf %126, %145 : vector<8x32xf32>
    %149 = arith.addf %147, %148 : vector<8x32xf32>
    %150 = math.tanh %149 : vector<8x32xf32>
    %151 = arith.mulf %150, %146 : vector<8x32xf32>
    %152 = arith.truncf %151 : vector<8x32xf32> to vector<8x32xbf16>
    %c6_i32 = arith.constant 6 : i32
    %c8_i32_39 = arith.constant 8 : i32
    %153 = arith.muli %c6_i32, %c8_i32_39 : i32
    %154 = tpu.assume_multiple %153, 8 : i32
    %155 = arith.index_cast %154 : i32 to index
    %c0_40 = arith.constant 0 : index
    %156 = vector.load %arg9[%155, %c0_40] : memref<64x128xf32, #tpu.memory_space<vmem>>, vector<8x128xf32>
    %cst_41 = arith.constant dense<0.000000e+00> : vector<8x128xf32>
    %157 = tpu.matmul %152, %12, %cst_41 {dimension_numbers = #tpu.dot_dimension_numbers<[1], [0], [0], [1], [0, 0, 1, 1], [], []>} : vector<8x32xbf16>, vector<32x128xbf16>, vector<8x128xf32> -> vector<8x128xf32>
    %158 = arith.addf %156, %157 : vector<8x128xf32>
    %159 = vector.extract_strided_slice %158 {offsets = [0, 0], sizes = [8, 32], strides = [1, 1]} : vector<8x128xf32> to vector<8x32xf32>
    %160 = math.tanh %159 : vector<8x32xf32>
    %161 = vector.extract_strided_slice %158 {offsets = [0, 32], sizes = [8, 96], strides = [1, 1]} : vector<8x128xf32> to vector<8x96xf32>
    %162 = arith.negf %161 : vector<8x96xf32>
    %163 = math.exp %162 : vector<8x96xf32>
    %cst_42 = arith.constant 1.000000e+00 : f32
    %164 = vector.broadcast %cst_42 : f32 to vector<8x96xf32>
    %165 = arith.addf %164, %163 : vector<8x96xf32>
    %166 = arith.divf %164, %165 : vector<8x96xf32>
    %167 = vector.extract_strided_slice %166 {offsets = [0, 0], sizes = [8, 32], strides = [1, 1]} : vector<8x96xf32> to vector<8x32xf32>
    %168 = vector.extract_strided_slice %166 {offsets = [0, 32], sizes = [8, 32], strides = [1, 1]} : vector<8x96xf32> to vector<8x32xf32>
    %169 = vector.extract_strided_slice %166 {offsets = [0, 64], sizes = [8, 32], strides = [1, 1]} : vector<8x96xf32> to vector<8x32xf32>
    %170 = arith.mulf %160, %167 : vector<8x32xf32>
    %171 = arith.mulf %149, %168 : vector<8x32xf32>
    %172 = arith.addf %170, %171 : vector<8x32xf32>
    %173 = math.tanh %172 : vector<8x32xf32>
    %174 = arith.mulf %173, %169 : vector<8x32xf32>
    %175 = arith.truncf %174 : vector<8x32xf32> to vector<8x32xbf16>
    %c7_i32 = arith.constant 7 : i32
    %c8_i32_43 = arith.constant 8 : i32
    %176 = arith.muli %c7_i32, %c8_i32_43 : i32
    %177 = tpu.assume_multiple %176, 8 : i32
    %178 = arith.index_cast %177 : i32 to index
    %c0_44 = arith.constant 0 : index
    %179 = vector.load %arg9[%178, %c0_44] : memref<64x128xf32, #tpu.memory_space<vmem>>, vector<8x128xf32>
    %cst_45 = arith.constant dense<0.000000e+00> : vector<8x128xf32>
    %180 = tpu.matmul %175, %12, %cst_45 {dimension_numbers = #tpu.dot_dimension_numbers<[1], [0], [0], [1], [0, 0, 1, 1], [], []>} : vector<8x32xbf16>, vector<32x128xbf16>, vector<8x128xf32> -> vector<8x128xf32>
    %181 = arith.addf %179, %180 : vector<8x128xf32>
    %182 = vector.extract_strided_slice %181 {offsets = [0, 0], sizes = [8, 32], strides = [1, 1]} : vector<8x128xf32> to vector<8x32xf32>
    %183 = math.tanh %182 : vector<8x32xf32>
    %184 = vector.extract_strided_slice %181 {offsets = [0, 32], sizes = [8, 96], strides = [1, 1]} : vector<8x128xf32> to vector<8x96xf32>
    %185 = arith.negf %184 : vector<8x96xf32>
    %186 = math.exp %185 : vector<8x96xf32>
    %cst_46 = arith.constant 1.000000e+00 : f32
    %187 = vector.broadcast %cst_46 : f32 to vector<8x96xf32>
    %188 = arith.addf %187, %186 : vector<8x96xf32>
    %189 = arith.divf %187, %188 : vector<8x96xf32>
    %190 = vector.extract_strided_slice %189 {offsets = [0, 0], sizes = [8, 32], strides = [1, 1]} : vector<8x96xf32> to vector<8x32xf32>
    %191 = vector.extract_strided_slice %189 {offsets = [0, 32], sizes = [8, 32], strides = [1, 1]} : vector<8x96xf32> to vector<8x32xf32>
    %192 = vector.extract_strided_slice %189 {offsets = [0, 64], sizes = [8, 32], strides = [1, 1]} : vector<8x96xf32> to vector<8x32xf32>
    %193 = arith.mulf %183, %190 : vector<8x32xf32>
    %194 = arith.mulf %172, %191 : vector<8x32xf32>
    %195 = arith.addf %193, %194 : vector<8x32xf32>
    %196 = math.tanh %195 : vector<8x32xf32>
    %197 = arith.mulf %196, %192 : vector<8x32xf32>
    %198 = arith.truncf %197 : vector<8x32xf32> to vector<8x32xbf16>
    %c8_i32_47 = arith.constant 8 : i32
    %c0_48 = arith.constant 0 : index
    %c0_49 = arith.constant 0 : index
    %199 = vector.load %arg7[%c0_48, %c0_49] : memref<8x32xbf16, #tpu.memory_space<vmem>>, vector<8x32xbf16>
    tpu.vector_store %arg7[%c0_48, %c0_49], %198 {strides = array<i32>} : memref<8x32xbf16, #tpu.memory_space<vmem>>, vector<8x32xbf16>,
    %c0_50 = arith.constant 0 : index
    %c0_51 = arith.constant 0 : index
    %200 = vector.load %arg8[%c0_50, %c0_51] : memref<8x32xf32, #tpu.memory_space<vmem>>, vector<8x32xf32>
    tpu.vector_store %arg8[%c0_50, %c0_51], %195 {strides = array<i32>} : memref<8x32xf32, #tpu.memory_space<vmem>>, vector<8x32xf32>,
    %c0_i32_52 = arith.constant 0 : i32
    %201 = arith.cmpi eq, %arg1, %c0_i32_52 : i32
    %202 = arith.extui %201 : i1 to i32
    %c0_i32_53 = arith.constant 0 : i32
    %203 = arith.cmpi ne, %202, %c0_i32_53 : i32
    scf.if %203 {
      %204 = arith.extf %198 : vector<8x32xbf16> to vector<8x32xf32>
      %c0_54 = arith.constant 0 : index
      %c0_55 = arith.constant 0 : index
      %205 = vector.load %arg6[%c0_54, %c0_55] : memref<8x32xf32, #tpu.memory_space<vmem>>, vector<8x32xf32>
      tpu.vector_store %arg6[%c0_54, %c0_55], %204 {strides = array<i32>} : memref<8x32xf32, #tpu.memory_space<vmem>>, vector<8x32xf32>,
    } else {
    }
    return
  }
  func.func @transform_0(%arg0: i32, %arg1: i32) -> (i32, i32, i32) {
    %c0_i32 = arith.constant 0 : i32
    %c0_i32_0 = arith.constant 0 : i32
    return %arg1, %arg0, %c0_i32 : i32, i32, i32
  }
  func.func @transform_1(%arg0: i32, %arg1: i32) -> (i32, i32) {
    %c0_i32 = arith.constant 0 : i32
    %c0_i32_0 = arith.constant 0 : i32
    %c0_i32_1 = arith.constant 0 : i32
    return %c0_i32, %c0_i32_0 : i32, i32
  }
  func.func @transform_2(%arg0: i32, %arg1: i32) -> (i32, i32) {
    %c0_i32 = arith.constant 0 : i32
    %c0_i32_0 = arith.constant 0 : i32
    %c0_i32_1 = arith.constant 0 : i32
    return %c0_i32, %c0_i32_0 : i32, i32
  }
  func.func @transform_3(%arg0: i32, %arg1: i32) -> (i32, i32) {
    %c0_i32 = arith.constant 0 : i32
    %c0_i32_0 = arith.constant 0 : i32
    %c0_i32_1 = arith.constant 0 : i32
    return %c0_i32, %c0_i32_0 : i32, i32
  }
  func.func @transform_4(%arg0: i32, %arg1: i32) -> (i32, i32) {
    %c0_i32 = arith.constant 0 : i32
    %c0_i32_0 = arith.constant 0 : i32
    return %arg0, %c0_i32 : i32, i32
  }
}

</mosaic_0001>

<llo_original>
// kernel: tpu_custom_call.1
$region0: #{tpu_custom_call.1}
  #allocation0 [shape = 'u32[]', space=smem, size = 0x4, offset = 0x4, fixed_abs, tag = 'smem constant byte address 0x4 - core index']
  #allocation1 [shape = 'u32[144,128]{1,0:T(1,128)}', space=vmem, size = 0x12000, scoped, tag = 'internal scratch']
  #allocation2 [shape = 'bf16[8,32]{1,0:T(8,128)(2,1)}', space=vmem, size = 0x800, scoped, tag = 'scratch operand']
  #allocation3 [shape = 'f32[8,32]{1,0:T(8,128)}', space=vmem, size = 0x1000, scoped, tag = 'scratch operand']
  #allocation4 [shape = 'f32[64,128]{1,0:T(8,128)}', space=vmem, size = 0x8000, scoped, tag = 'scratch operand']
  %s0 = inlined_call_operand.vmem [shape: f32[8,8,4], index: 0, kind: input, shape index: {}]
  %s1 = inlined_call_operand.vmem [shape: bf16[4,128], index: 1, kind: input, shape index: {}]
  %s2 = inlined_call_operand.vmem [shape: bf16[32,128], index: 2, kind: input, shape index: {}]
  %s3 = inlined_call_operand.vmem [shape: f32[1,128], index: 3, kind: input, shape index: {}]
  %s4 = inlined_call_operand.hbm [shape: f32[8,32], index: 4, kind: output, shape index: {}]
  %s5 = sld [smem:[#allocation0]]
  $region34: #{tpu_custom_call.1} parent=0
    _
  %s7 = ssub.s32 1, %s5
  %s8 = scalar_select 0, %s7, %s5
  $region1: #{tpu_custom_call.1} parent=0
    #allocation5 [shape = 'u8[4096]{0}', space=vmem, size = 0x1000, scoped, tag = 'output window, operand 0, single buffered']
    #allocation6 [shape = 's32[1]{0}', space=sflag, size = 0x4, scoped, tag = 'scoped memory for tpu_custom_call.1']
    %9 = vsyncpa [#allocation6], 0
    // Predicated region
    $region2: #{tpu_custom_call.1} parent=1 // pred_check
      _
    $region3: #{tpu_custom_call.1} parent=1 // pred_check_branch
      %11 = sbr.rel (0) target = $region5
    $region4: #{tpu_custom_call.1} parent=1 // pred_region
      _
    $region5: #{tpu_custom_call.1} parent=1 // pred_fallthru
      _
    // Predicated region
    $region6: #{tpu_custom_call.1} parent=1 // pred_check
      _
    $region7: #{tpu_custom_call.1} parent=1 // pred_check_branch
      %13 = sbr.rel (0) target = $region9
    $region8: #{tpu_custom_call.1} parent=1 // pred_region
      _
    $region9: #{tpu_custom_call.1} parent=1 // pred_fallthru
      _
    // Predicated region
    $region10: #{tpu_custom_call.1} parent=1 // pred_check
      _
    $region11: #{tpu_custom_call.1} parent=1 // pred_check_branch
      %15 = sbr.rel (0) target = $region13
    $region12: #{tpu_custom_call.1} parent=1 // pred_region
      _
    $region13: #{tpu_custom_call.1} parent=1 // pred_fallthru
      _
    // Predicated region
    $region14: #{tpu_custom_call.1} parent=1 // pred_check
      _
    $region15: #{tpu_custom_call.1} parent=1 // pred_check_branch
      %17 = sbr.rel (0) target = $region17
    $region16: #{tpu_custom_call.1} parent=1 // pred_region
      _
    $region17: #{tpu_custom_call.1} parent=1 // pred_fallthru
      _
    %p19 = scmp.eq.s32.totalorder 0, 0
    // Predicated region
    $region18: #{tpu_custom_call.1} parent=1 // pred_check
      %p20 = pneg %p19
    $region19: #{tpu_custom_call.1} parent=1 // pred_check_branch
      %22 = sbr.rel (%p20) target = $region21
    $region20: #{tpu_custom_call.1} parent=1 // pred_region
      %vm23 = vcmask 257024
      %24 = vst.msk [vmem:[#allocation2] sm:$0xf] %vm23, 0
      %vm25 = vcmask 261120
      %26 = vst.msk [vmem:[#allocation3] sm:$0xff] %vm25, 0.0
    $region21: #{tpu_custom_call.1} parent=1 // pred_fallthru
      _
    %v27 = vld [vmem:[%s0] sm:$0xff]
    %v28 = vld [vmem:[%s0 + $0x8] sm:$0xff]
    %v29 = vld [vmem:[%s0 + $0x10] sm:$0xff]
    %v30 = vld [vmem:[%s0 + $0x18] sm:$0xff]
    %v31 = vld [vmem:[%s0 + $0x20] sm:$0xff]
    %v32 = vld [vmem:[%s0 + $0x28] sm:$0xff]
    %v33 = vld [vmem:[%s0 + $0x30] sm:$0xff]
    %v34 = vld [vmem:[%s0 + $0x38] sm:$0xff]
    %v35 = vpack.c.bf16 %v28, %v27
    %v36 = vpack.c.bf16 %v30, %v29
    %v37 = vpack.c.bf16 %v32, %v31
    %v38 = vpack.c.bf16 %v34, %v33
    %v39 = vld [vmem:[%s1] sm:$0x3]
    %v40 = vld [vmem:[%s3] sm:$0x1]
    %v42 = vlaneseq
    %v43 = vshrl.u32 %v42, 7
    %v44 = vsub.s32 0, %v43
    %v45 = vrot.slane %v40, %v44
    %vm47 = vcmask 31744
    %v49 = vsel %vm47, %v35, 0
    %v52 = vsel %vm47, %v36, 0
    %v55 = vsel %vm47, %v37, 0
    %v58 = vsel %vm47, %v38, 0
    %vm60 = vcmask 1041408
    %v62 = vsel %vm60, %v39, 0
    %64 = vmatprep.subr.bf16.mxu0 0
    %65 = vmatpush1.bf16.msra.mxu0 %v62
    %66 = vmatprep.subr.bf16.mxu0 0
    %67 = vmatpush1.bf16.msra.mxu0 0
    %68 = vmatprep.subr.bf16.mxu0 0
    %69 = vmatpush1.bf16.msra.mxu0 0
    %70 = vmatprep.subr.bf16.mxu0 0
    %71 = vmatpush1.bf16.msra.mxu0 0
    %72 = vmatprep.subr.bf16.mxu0 0
    %73 = vmatpush1.bf16.msra.mxu0 0
    %74 = vmatprep.subr.bf16.mxu0 0
    %75 = vmatpush1.bf16.msra.mxu0 0
    %76 = vmatprep.subr.bf16.mxu0 0
    %77 = vmatpush1.bf16.msra.mxu0 0
    %78 = vmatprep.subr.bf16.mxu0 0
    %79 = vmatpush1.bf16.msra.mxu0 0
    %80 = vmatprep.subr.bf16.mxu0 0
    %81 = vmatpush1.bf16.msra.mxu0 0
    %82 = vmatprep.subr.bf16.mxu0 0
    %83 = vmatpush1.bf16.msra.mxu0 0
    %84 = vmatprep.subr.bf16.mxu0 0
    %85 = vmatpush1.bf16.msra.mxu0 0
    %86 = vmatprep.subr.bf16.mxu0 0
    %87 = vmatpush1.bf16.msra.mxu0 0
    %88 = vmatprep.subr.bf16.mxu0 0
    %89 = vmatpush1.bf16.msra.mxu0 0
    %90 = vmatprep.subr.bf16.mxu0 0
    %91 = vmatpush1.bf16.msra.mxu0 0
    %92 = vmatprep.subr.bf16.mxu0 0
    %93 = vmatpush1.bf16.msra.mxu0 0
    %94 = vmatprep.subr.bf16.mxu0 0
    %95 = vmatpush1.bf16.msra.mxu0 0
    %96 = vmatprep.mubr.bf16.mxu0 0
    %97 = vmatmul.mubr.bf16.gmra.mrb[0].mxu0 %v49
    %v98 = vpop.f32.mrb[0].mxu0
    %v99 = vadd.f32 %v45, %v98
    %v100 = vpop.f32.mrb[0].mxu0
    %v101 = vpop.f32.mrb[0].mxu0
    %v102 = vadd.f32 %v45, %v101
    %v103 = vpop.f32.mrb[0].mxu0
    %104 = vmatprep.mubr.bf16.mxu0 0
    %105 = vmatmul.mubr.bf16.gmra.mrb[0].mxu0 %v52
    %v106 = vpop.f32.mrb[0].mxu0
    %v107 = vadd.f32 %v45, %v106
    %v108 = vpop.f32.mrb[0].mxu0
    %v109 = vpop.f32.mrb[0].mxu0
    %v110 = vadd.f32 %v45, %v109
    %v111 = vpop.f32.mrb[0].mxu0
    %112 = vmatprep.mubr.bf16.mxu0 0
    %113 = vmatmul.mubr.bf16.gmra.mrb[0].mxu0 %v55
    %v114 = vpop.f32.mrb[0].mxu0
    %v115 = vadd.f32 %v45, %v114
    %v116 = vpop.f32.mrb[0].mxu0
    %v117 = vpop.f32.mrb[0].mxu0
    %v118 = vadd.f32 %v45, %v117
    %v119 = vpop.f32.mrb[0].mxu0
    %120 = vmatprep.mubr.bf16.mxu0 0
    %121 = vmatmul.mubr.bf16.gmra.mrb[0].mxu0 %v58
    %v122 = vpop.f32.mrb[0].mxu0
    %v123 = vadd.f32 %v45, %v122
    %v124 = vpop.f32.mrb[0].mxu0
    %v125 = vpop.f32.mrb[0].mxu0
    %v126 = vadd.f32 %v45, %v125
    %v127 = vpop.f32.mrb[0].mxu0
    %128 = vdwg.mxu0
    %129 = vst [vmem:[#allocation4] sm:$0xff] %v99
    %130 = vst [vmem:[#allocation4 + $0x8] sm:$0xff] %v102
    %131 = vst [vmem:[#allocation4 + $0x10] sm:$0xff] %v107
    %132 = vst [vmem:[#allocation4 + $0x18] sm:$0xff] %v110
    %133 = vst [vmem:[#allocation4 + $0x20] sm:$0xff] %v115
    %134 = vst [vmem:[#allocation4 + $0x28] sm:$0xff] %v118
    %135 = vst [vmem:[#allocation4 + $0x30] sm:$0xff] %v123
    %136 = vst [vmem:[#allocation4 + $0x38] sm:$0xff] %v126
    %v137 = vld [vmem:[%s2] sm:$0xf]
    %v138 = vld [vmem:[%s2 + $0x4] sm:$0xf]
    %v139 = vld [vmem:[%s2 + $0x8] sm:$0xf]
    %v140 = vld [vmem:[%s2 + $0xc] sm:$0xf]
    %v141 = vld [vmem:[#allocation2] sm:$0xf]
    %v142 = vld [vmem:[#allocation3] sm:$0xff]
    %v143 = vld [vmem:[#allocation4] sm:$0xff]
    %v148 = vunpack.c.l.b16 %v137
    %v149 = vunpack.c.l.b16 %v138
    %v150 = vunpack.c.l.b16 %v139
    %v151 = vunpack.c.l.b16 %v140
    %v152 = vpack.c.b16 %v149, %v148
    %v153 = vpack.c.b16 %v151, %v150
    %vm156 = vcmask 261120
    %v158 = vsel %vm156, %v141, 0
    %160 = vmatprep.subr.bf16.mxu0 0
    %161 = vmatpush1.bf16.msra.mxu0 %v152
    %162 = vmatprep.subr.bf16.mxu0 0
    %163 = vmatpush1.bf16.msra.mxu0 %v153
    %164 = vmatprep.subr.bf16.mxu0 0
    %165 = vmatpush1.bf16.msra.mxu0 0
    %166 = vmatprep.subr.bf16.mxu0 0
    %167 = vmatpush1.bf16.msra.mxu0 0
    %168 = vmatprep.subr.bf16.mxu0 0
    %169 = vmatpush1.bf16.msra.mxu0 0
    %170 = vmatprep.subr.bf16.mxu0 0
    %171 = vmatpush1.bf16.msra.mxu0 0
    %172 = vmatprep.subr.bf16.mxu0 0
    %173 = vmatpush1.bf16.msra.mxu0 0
    %174 = vmatprep.subr.bf16.mxu0 0
    %175 = vmatpush1.bf16.msra.mxu0 0
    %176 = vmatprep.subr.bf16.mxu0 0
    %177 = vmatpush1.bf16.msra.mxu0 0
    %178 = vmatprep.subr.bf16.mxu0 0
    %179 = vmatpush1.bf16.msra.mxu0 0
    %180 = vmatprep.subr.bf16.mxu0 0
    %181 = vmatpush1.bf16.msra.mxu0 0
    %182 = vmatprep.subr.bf16.mxu0 0
    %183 = vmatpush1.bf16.msra.mxu0 0
    %184 = vmatprep.subr.bf16.mxu0 0
    %185 = vmatpush1.bf16.msra.mxu0 0
    %186 = vmatprep.subr.bf16.mxu0 0
    %187 = vmatpush1.bf16.msra.mxu0 0
    %188 = vmatprep.subr.bf16.mxu0 0
    %189 = vmatpush1.bf16.msra.mxu0 0
    %190 = vmatprep.subr.bf16.mxu0 0
    %191 = vmatpush1.bf16.msra.mxu0 0
    %192 = vmatprep.mubr.bf16.mxu0 0
    %193 = vmatmul.mubr.bf16.gmra.mrb[0].mxu0 %v158
    %v194 = vpop.f32.mrb[0].mxu0
    %v195 = vadd.f32 0.0, %v194
    %v196 = vpop.f32.mrb[0].mxu0
    %v197 = vpop.f32.mrb[0].mxu0
    %v198 = vpop.f32.mrb[0].mxu0
    %199 = vdwg.mxu0
    %v200 = vadd.f32 %v143, %v195
    %v201 = vtanh.pop %v200
    %v202 = vxor.u32 %v200, 2147483648
    %v203 = vmul.f32 %v202, 1.442695
    %v204 = vpow.pop %v203
    %v205 = vadd.f32 %v204, 1.0
    %v206 = vrcp.pop %v205
    %v207 = vmul.f32 1.0, %v206
    %209 = vrot.lane.b32.xlu0 %v207, 96
    %v210 = vpop.permute.xlu0 %209
    %v212 = vmul.f32 %v201, %v210
    %213 = vrot.lane.b32.xlu0 %v207, 64
    %v214 = vpop.permute.xlu0 %213
    %v216 = vmul.f32 %v142, %v214
    %v217 = vadd.f32 %v212, %v216
    %v218 = vtanh.pop %v217
    %219 = vrot.lane.b32.xlu0 %v207, 32
    %v220 = vpop.permute.xlu0 %219
    %v222 = vmul.f32 %v218, %v220
    %v223 = vpack.c.bf16 %v222, %v222
    %s224 = scalar_lea.vmem [#allocation4], 8
    %v225 = vld [vmem:[%s224] sm:$0xff]
    %v227 = vsel %vm156, %v223, 0
    %229 = vmatprep.subr.bf16.mxu0 0
    %230 = vmatpush1.bf16.msra.mxu0 %v152
    %231 = vmatprep.subr.bf16.mxu0 0
    %232 = vmatpush1.bf16.msra.mxu0 %v153
    %233 = vmatprep.subr.bf16.mxu0 0
    %234 = vmatpush1.bf16.msra.mxu0 0
    %235 = vmatprep.subr.bf16.mxu0 0
    %236 = vmatpush1.bf16.msra.mxu0 0
    %237 = vmatprep.subr.bf16.mxu0 0
    %238 = vmatpush1.bf16.msra.mxu0 0
    %239 = vmatprep.subr.bf16.mxu0 0
    %240 = vmatpush1.bf16.msra.mxu0 0
    %241 = vmatprep.subr.bf16.mxu0 0
    %242 = vmatpush1.bf16.msra.mxu0 0
    %243 = vmatprep.subr.bf16.mxu0 0
    %244 = vmatpush1.bf16.msra.mxu0 0
    %245 = vmatprep.subr.bf16.mxu0 0
    %246 = vmatpush1.bf16.msra.mxu0 0
    %247 = vmatprep.subr.bf16.mxu0 0
    %248 = vmatpush1.bf16.msra.mxu0 0
    %249 = vmatprep.subr.bf16.mxu0 0
    %250 = vmatpush1.bf16.msra.mxu0 0
    %251 = vmatprep.subr.bf16.mxu0 0
    %252 = vmatpush1.bf16.msra.mxu0 0
    %253 = vmatprep.subr.bf16.mxu0 0
    %254 = vmatpush1.bf16.msra.mxu0 0
    %255 = vmatprep.subr.bf16.mxu0 0
    %256 = vmatpush1.bf16.msra.mxu0 0
    %257 = vmatprep.subr.bf16.mxu0 0
    %258 = vmatpush1.bf16.msra.mxu0 0
    %259 = vmatprep.subr.bf16.mxu0 0
    %260 = vmatpush1.bf16.msra.mxu0 0
    %261 = vmatprep.mubr.bf16.mxu0 0
    %262 = vmatmul.mubr.bf16.gmra.mrb[0].mxu0 %v227
    %v263 = vpop.f32.mrb[0].mxu0
    %v264 = vadd.f32 0.0, %v263
    %v265 = vpop.f32.mrb[0].mxu0
    %v266 = vpop.f32.mrb[0].mxu0
    %v267 = vpop.f32.mrb[0].mxu0
    %268 = vdwg.mxu0
    %v269 = vadd.f32 %v225, %v264
    %v270 = vtanh.pop %v269
    %v271 = vxor.u32 %v269, 2147483648
    %v272 = vmul.f32 %v271, 1.442695
    %v273 = vpow.pop %v272
    %v274 = vadd.f32 %v273, 1.0
    %v275 = vrcp.pop %v274
    %v276 = vmul.f32 1.0, %v275
    %278 = vrot.lane.b32.xlu0 %v276, 96
    %v279 = vpop.permute.xlu0 %278
    %v281 = vmul.f32 %v270, %v279
    %282 = vrot.lane.b32.xlu0 %v276, 64
    %v283 = vpop.permute.xlu0 %282
    %v285 = vmul.f32 %v217, %v283
    %v286 = vadd.f32 %v281, %v285
    %v287 = vtanh.pop %v286
    %288 = vrot.lane.b32.xlu0 %v276, 32
    %v289 = vpop.permute.xlu0 %288
    %v291 = vmul.f32 %v287, %v289
    %v292 = vpack.c.bf16 %v291, %v291
    %s293 = scalar_lea.vmem [#allocation4], 16
    %v294 = vld [vmem:[%s293] sm:$0xff]
    %v296 = vsel %vm156, %v292, 0
    %298 = vmatprep.subr.bf16.mxu0 0
    %299 = vmatpush1.bf16.msra.mxu0 %v152
    %300 = vmatprep.subr.bf16.mxu0 0
    %301 = vmatpush1.bf16.msra.mxu0 %v153
    %302 = vmatprep.subr.bf16.mxu0 0
    %303 = vmatpush1.bf16.msra.mxu0 0
    %304 = vmatprep.subr.bf16.mxu0 0
    %305 = vmatpush1.bf16.msra.mxu0 0
    %306 = vmatprep.subr.bf16.mxu0 0
    %307 = vmatpush1.bf16.msra.mxu0 0
    %308 = vmatprep.subr.bf16.mxu0 0
    %309 = vmatpush1.bf16.msra.mxu0 0
    %310 = vmatprep.subr.bf16.mxu0 0
    %311 = vmatpush1.bf16.msra.mxu0 0
    %312 = vmatprep.subr.bf16.mxu0 0
    %313 = vmatpush1.bf16.msra.mxu0 0
    %314 = vmatprep.subr.bf16.mxu0 0
    %315 = vmatpush1.bf16.msra.mxu0 0
    %316 = vmatprep.subr.bf16.mxu0 0
    %317 = vmatpush1.bf16.msra.mxu0 0
    %318 = vmatprep.subr.bf16.mxu0 0
    %319 = vmatpush1.bf16.msra.mxu0 0
    %320 = vmatprep.subr.bf16.mxu0 0
    %321 = vmatpush1.bf16.msra.mxu0 0
    %322 = vmatprep.subr.bf16.mxu0 0
    %323 = vmatpush1.bf16.msra.mxu0 0
    %324 = vmatprep.subr.bf16.mxu0 0
    %325 = vmatpush1.bf16.msra.mxu0 0
    %326 = vmatprep.subr.bf16.mxu0 0
    %327 = vmatpush1.bf16.msra.mxu0 0
    %328 = vmatprep.subr.bf16.mxu0 0
    %329 = vmatpush1.bf16.msra.mxu0 0
    %330 = vmatprep.mubr.bf16.mxu0 0
    %331 = vmatmul.mubr.bf16.gmra.mrb[0].mxu0 %v296
    %v332 = vpop.f32.mrb[0].mxu0
    %v333 = vadd.f32 0.0, %v332
    %v334 = vpop.f32.mrb[0].mxu0
    %v335 = vpop.f32.mrb[0].mxu0
    %v336 = vpop.f32.mrb[0].mxu0
    %337 = vdwg.mxu0
    %v338 = vadd.f32 %v294, %v333
    %v339 = vtanh.pop %v338
    %v340 = vxor.u32 %v338, 2147483648
    %v341 = vmul.f32 %v340, 1.442695
    %v342 = vpow.pop %v341
    %v343 = vadd.f32 %v342, 1.0
    %v344 = vrcp.pop %v343
    %v345 = vmul.f32 1.0, %v344
    %347 = vrot.lane.b32.xlu0 %v345, 96
    %v348 = vpop.permute.xlu0 %347
    %v350 = vmul.f32 %v339, %v348
    %351 = vrot.lane.b32.xlu0 %v345, 64
    %v352 = vpop.permute.xlu0 %351
    %v354 = vmul.f32 %v286, %v352
    %v355 = vadd.f32 %v350, %v354
    %v356 = vtanh.pop %v355
    %357 = vrot.lane.b32.xlu0 %v345, 32
    %v358 = vpop.permute.xlu0 %357
    %v360 = vmul.f32 %v356, %v358
    %v361 = vpack.c.bf16 %v360, %v360
    %s362 = scalar_lea.vmem [#allocation4], 24
    %v363 = vld [vmem:[%s362] sm:$0xff]
    %v365 = vsel %vm156, %v361, 0
    %367 = vmatprep.subr.bf16.mxu0 0
    %368 = vmatpush1.bf16.msra.mxu0 %v152
    %369 = vmatprep.subr.bf16.mxu0 0
    %370 = vmatpush1.bf16.msra.mxu0 %v153
    %371 = vmatprep.subr.bf16.mxu0 0
    %372 = vmatpush1.bf16.msra.mxu0 0
    %373 = vmatprep.subr.bf16.mxu0 0
    %374 = vmatpush1.bf16.msra.mxu0 0
    %375 = vmatprep.subr.bf16.mxu0 0
    %376 = vmatpush1.bf16.msra.mxu0 0
    %377 = vmatprep.subr.bf16.mxu0 0
    %378 = vmatpush1.bf16.msra.mxu0 0
    %379 = vmatprep.subr.bf16.mxu0 0
    %380 = vmatpush1.bf16.msra.mxu0 0
    %381 = vmatprep.subr.bf16.mxu0 0
    %382 = vmatpush1.bf16.msra.mxu0 0
    %383 = vmatprep.subr.bf16.mxu0 0
    %384 = vmatpush1.bf16.msra.mxu0 0
    %385 = vmatprep.subr.bf16.mxu0 0
    %386 = vmatpush1.bf16.msra.mxu0 0
    %387 = vmatprep.subr.bf16.mxu0 0
    %388 = vmatpush1.bf16.msra.mxu0 0
    %389 = vmatprep.subr.bf16.mxu0 0
    %390 = vmatpush1.bf16.msra.mxu0 0
    %391 = vmatprep.subr.bf16.mxu0 0
    %392 = vmatpush1.bf16.msra.mxu0 0
    %393 = vmatprep.subr.bf16.mxu0 0
    %394 = vmatpush1.bf16.msra.mxu0 0
    %395 = vmatprep.subr.bf16.mxu0 0
    %396 = vmatpush1.bf16.msra.mxu0 0
    %397 = vmatprep.subr.bf16.mxu0 0
    %398 = vmatpush1.bf16.msra.mxu0 0
    %399 = vmatprep.mubr.bf16.mxu0 0
    %400 = vmatmul.mubr.bf16.gmra.mrb[0].mxu0 %v365
    %v401 = vpop.f32.mrb[0].mxu0
    %v402 = vadd.f32 0.0, %v401
    %v403 = vpop.f32.mrb[0].mxu0
    %v404 = vpop.f32.mrb[0].mxu0
    %v405 = vpop.f32.mrb[0].mxu0
    %406 = vdwg.mxu0
    %v407 = vadd.f32 %v363, %v402
    %v408 = vtanh.pop %v407
    %v409 = vxor.u32 %v407, 2147483648
    %v410 = vmul.f32 %v409, 1.442695
    %v411 = vpow.pop %v410
    %v412 = vadd.f32 %v411, 1.0
    %v413 = vrcp.pop %v412
    %v414 = vmul.f32 1.0, %v413
    %416 = vrot.lane.b32.xlu0 %v414, 96
    %v417 = vpop.permute.xlu0 %416
    %v419 = vmul.f32 %v408, %v417
    %420 = vrot.lane.b32.xlu0 %v414, 64
    %v421 = vpop.permute.xlu0 %420
    %v423 = vmul.f32 %v355, %v421
    %v424 = vadd.f32 %v419, %v423
    %v425 = vtanh.pop %v424
    %426 = vrot.lane.b32.xlu0 %v414, 32
    %v427 = vpop.permute.xlu0 %426
    %v429 = vmul.f32 %v425, %v427
    %v430 = vpack.c.bf16 %v429, %v429
    %s431 = scalar_lea.vmem [#allocation4], 32
    %v432 = vld [vmem:[%s431] sm:$0xff]
    %v434 = vsel %vm156, %v430, 0
    %436 = vmatprep.subr.bf16.mxu0 0
    %437 = vmatpush1.bf16.msra.mxu0 %v152
    %438 = vmatprep.subr.bf16.mxu0 0
    %439 = vmatpush1.bf16.msra.mxu0 %v153
    %440 = vmatprep.subr.bf16.mxu0 0
    %441 = vmatpush1.bf16.msra.mxu0 0
    %442 = vmatprep.subr.bf16.mxu0 0
    %443 = vmatpush1.bf16.msra.mxu0 0
    %444 = vmatprep.subr.bf16.mxu0 0
    %445 = vmatpush1.bf16.msra.mxu0 0
    %446 = vmatprep.subr.bf16.mxu0 0
    %447 = vmatpush1.bf16.msra.mxu0 0
    %448 = vmatprep.subr.bf16.mxu0 0
    %449 = vmatpush1.bf16.msra.mxu0 0
    %450 = vmatprep.subr.bf16.mxu0 0
    %451 = vmatpush1.bf16.msra.mxu0 0
    %452 = vmatprep.subr.bf16.mxu0 0
    %453 = vmatpush1.bf16.msra.mxu0 0
    %454 = vmatprep.subr.bf16.mxu0 0
    %455 = vmatpush1.bf16.msra.mxu0 0
    %456 = vmatprep.subr.bf16.mxu0 0
    %457 = vmatpush1.bf16.msra.mxu0 0
    %458 = vmatprep.subr.bf16.mxu0 0
    %459 = vmatpush1.bf16.msra.mxu0 0
    %460 = vmatprep.subr.bf16.mxu0 0
    %461 = vmatpush1.bf16.msra.mxu0 0
    %462 = vmatprep.subr.bf16.mxu0 0
    %463 = vmatpush1.bf16.msra.mxu0 0
    %464 = vmatprep.subr.bf16.mxu0 0
    %465 = vmatpush1.bf16.msra.mxu0 0
    %466 = vmatprep.subr.bf16.mxu0 0
    %467 = vmatpush1.bf16.msra.mxu0 0
    %468 = vmatprep.mubr.bf16.mxu0 0
    %469 = vmatmul.mubr.bf16.gmra.mrb[0].mxu0 %v434
    %v470 = vpop.f32.mrb[0].mxu0
    %v471 = vadd.f32 0.0, %v470
    %v472 = vpop.f32.mrb[0].mxu0
    %v473 = vpop.f32.mrb[0].mxu0
    %v474 = vpop.f32.mrb[0].mxu0
    %475 = vdwg.mxu0
    %v476 = vadd.f32 %v432, %v471
    %v477 = vtanh.pop %v476
    %v478 = vxor.u32 %v476, 2147483648
    %v479 = vmul.f32 %v478, 1.442695
    %v480 = vpow.pop %v479
    %v481 = vadd.f32 %v480, 1.0
    %v482 = vrcp.pop %v481
    %v483 = vmul.f32 1.0, %v482
    %485 = vrot.lane.b32.xlu0 %v483, 96
    %v486 = vpop.permute.xlu0 %485
    %v488 = vmul.f32 %v477, %v486
    %489 = vrot.lane.b32.xlu0 %v483, 64
    %v490 = vpop.permute.xlu0 %489
    %v492 = vmul.f32 %v424, %v490
    %v493 = vadd.f32 %v488, %v492
    %v494 = vtanh.pop %v493
    %495 = vrot.lane.b32.xlu0 %v483, 32
    %v496 = vpop.permute.xlu0 %495
    %v498 = vmul.f32 %v494, %v496
    %v499 = vpack.c.bf16 %v498, %v498
    %s500 = scalar_lea.vmem [#allocation4], 40
    %v501 = vld [vmem:[%s500] sm:$0xff]
    %v503 = vsel %vm156, %v499, 0
    %505 = vmatprep.subr.bf16.mxu0 0
    %506 = vmatpush1.bf16.msra.mxu0 %v152
    %507 = vmatprep.subr.bf16.mxu0 0
    %508 = vmatpush1.bf16.msra.mxu0 %v153
    %509 = vmatprep.subr.bf16.mxu0 0
    %510 = vmatpush1.bf16.msra.mxu0 0
    %511 = vmatprep.subr.bf16.mxu0 0
    %512 = vmatpush1.bf16.msra.mxu0 0
    %513 = vmatprep.subr.bf16.mxu0 0
    %514 = vmatpush1.bf16.msra.mxu0 0
    %515 = vmatprep.subr.bf16.mxu0 0
    %516 = vmatpush1.bf16.msra.mxu0 0
    %517 = vmatprep.subr.bf16.mxu0 0
    %518 = vmatpush1.bf16.msra.mxu0 0
    %519 = vmatprep.subr.bf16.mxu0 0
    %520 = vmatpush1.bf16.msra.mxu0 0
    %521 = vmatprep.subr.bf16.mxu0 0
    %522 = vmatpush1.bf16.msra.mxu0 0
    %523 = vmatprep.subr.bf16.mxu0 0
    %524 = vmatpush1.bf16.msra.mxu0 0
    %525 = vmatprep.subr.bf16.mxu0 0
    %526 = vmatpush1.bf16.msra.mxu0 0
    %527 = vmatprep.subr.bf16.mxu0 0
    %528 = vmatpush1.bf16.msra.mxu0 0
    %529 = vmatprep.subr.bf16.mxu0 0
    %530 = vmatpush1.bf16.msra.mxu0 0
    %531 = vmatprep.subr.bf16.mxu0 0
    %532 = vmatpush1.bf16.msra.mxu0 0
    %533 = vmatprep.subr.bf16.mxu0 0
    %534 = vmatpush1.bf16.msra.mxu0 0
    %535 = vmatprep.subr.bf16.mxu0 0
    %536 = vmatpush1.bf16.msra.mxu0 0
    %537 = vmatprep.mubr.bf16.mxu0 0
    %538 = vmatmul.mubr.bf16.gmra.mrb[0].mxu0 %v503
    %v539 = vpop.f32.mrb[0].mxu0
    %v540 = vadd.f32 0.0, %v539
    %v541 = vpop.f32.mrb[0].mxu0
    %v542 = vpop.f32.mrb[0].mxu0
    %v543 = vpop.f32.mrb[0].mxu0
    %544 = vdwg.mxu0
    %v545 = vadd.f32 %v501, %v540
    %v546 = vtanh.pop %v545
    %v547 = vxor.u32 %v545, 2147483648
    %v548 = vmul.f32 %v547, 1.442695
    %v549 = vpow.pop %v548
    %v550 = vadd.f32 %v549, 1.0
    %v551 = vrcp.pop %v550
    %v552 = vmul.f32 1.0, %v551
    %554 = vrot.lane.b32.xlu0 %v552, 96
    %v555 = vpop.permute.xlu0 %554
    %v557 = vmul.f32 %v546, %v555
    %558 = vrot.lane.b32.xlu0 %v552, 64
    %v559 = vpop.permute.xlu0 %558
    %v561 = vmul.f32 %v493, %v559
    %v562 = vadd.f32 %v557, %v561
    %v563 = vtanh.pop %v562
    %564 = vrot.lane.b32.xlu0 %v552, 32
    %v565 = vpop.permute.xlu0 %564
    %v567 = vmul.f32 %v563, %v565
    %v568 = vpack.c.bf16 %v567, %v567
    %s569 = scalar_lea.vmem [#allocation4], 48
    %v570 = vld [vmem:[%s569] sm:$0xff]
    %v572 = vsel %vm156, %v568, 0
    %574 = vmatprep.subr.bf16.mxu0 0
    %575 = vmatpush1.bf16.msra.mxu0 %v152
    %576 = vmatprep.subr.bf16.mxu0 0
    %577 = vmatpush1.bf16.msra.mxu0 %v153
    %578 = vmatprep.subr.bf16.mxu0 0
    %579 = vmatpush1.bf16.msra.mxu0 0
    %580 = vmatprep.subr.bf16.mxu0 0
    %581 = vmatpush1.bf16.msra.mxu0 0
    %582 = vmatprep.subr.bf16.mxu0 0
    %583 = vmatpush1.bf16.msra.mxu0 0
    %584 = vmatprep.subr.bf16.mxu0 0
    %585 = vmatpush1.bf16.msra.mxu0 0
    %586 = vmatprep.subr.bf16.mxu0 0
    %587 = vmatpush1.bf16.msra.mxu0 0
    %588 = vmatprep.subr.bf16.mxu0 0
    %589 = vmatpush1.bf16.msra.mxu0 0
    %590 = vmatprep.subr.bf16.mxu0 0
    %591 = vmatpush1.bf16.msra.mxu0 0
    %592 = vmatprep.subr.bf16.mxu0 0
    %593 = vmatpush1.bf16.msra.mxu0 0
    %594 = vmatprep.subr.bf16.mxu0 0
    %595 = vmatpush1.bf16.msra.mxu0 0
    %596 = vmatprep.subr.bf16.mxu0 0
    %597 = vmatpush1.bf16.msra.mxu0 0
    %598 = vmatprep.subr.bf16.mxu0 0
    %599 = vmatpush1.bf16.msra.mxu0 0
    %600 = vmatprep.subr.bf16.mxu0 0
    %601 = vmatpush1.bf16.msra.mxu0 0
    %602 = vmatprep.subr.bf16.mxu0 0
    %603 = vmatpush1.bf16.msra.mxu0 0
    %604 = vmatprep.subr.bf16.mxu0 0
    %605 = vmatpush1.bf16.msra.mxu0 0
    %606 = vmatprep.mubr.bf16.mxu0 0
    %607 = vmatmul.mubr.bf16.gmra.mrb[0].mxu0 %v572
    %v608 = vpop.f32.mrb[0].mxu0
    %v609 = vadd.f32 0.0, %v608
    %v610 = vpop.f32.mrb[0].mxu0
    %v611 = vpop.f32.mrb[0].mxu0
    %v612 = vpop.f32.mrb[0].mxu0
    %613 = vdwg.mxu0
    %v614 = vadd.f32 %v570, %v609
    %v615 = vtanh.pop %v614
    %v616 = vxor.u32 %v614, 2147483648
    %v617 = vmul.f32 %v616, 1.442695
    %v618 = vpow.pop %v617
    %v619 = vadd.f32 %v618, 1.0
    %v620 = vrcp.pop %v619
    %v621 = vmul.f32 1.0, %v620
    %623 = vrot.lane.b32.xlu0 %v621, 96
    %v624 = vpop.permute.xlu0 %623
    %v626 = vmul.f32 %v615, %v624
    %627 = vrot.lane.b32.xlu0 %v621, 64
    %v628 = vpop.permute.xlu0 %627
    %v630 = vmul.f32 %v562, %v628
    %v631 = vadd.f32 %v626, %v630
    %v632 = vtanh.pop %v631
    %633 = vrot.lane.b32.xlu0 %v621, 32
    %v634 = vpop.permute.xlu0 %633
    %v636 = vmul.f32 %v632, %v634
    %v637 = vpack.c.bf16 %v636, %v636
    %s638 = scalar_lea.vmem [#allocation4], 56
    %v639 = vld [vmem:[%s638] sm:$0xff]
    %v641 = vsel %vm156, %v637, 0
    %643 = vmatprep.subr.bf16.mxu0 0
    %644 = vmatpush1.bf16.msra.mxu0 %v152
    %645 = vmatprep.subr.bf16.mxu0 0
    %646 = vmatpush1.bf16.msra.mxu0 %v153
    %647 = vmatprep.subr.bf16.mxu0 0
    %648 = vmatpush1.bf16.msra.mxu0 0
    %649 = vmatprep.subr.bf16.mxu0 0
    %650 = vmatpush1.bf16.msra.mxu0 0
    %651 = vmatprep.subr.bf16.mxu0 0
    %652 = vmatpush1.bf16.msra.mxu0 0
    %653 = vmatprep.subr.bf16.mxu0 0
    %654 = vmatpush1.bf16.msra.mxu0 0
    %655 = vmatprep.subr.bf16.mxu0 0
    %656 = vmatpush1.bf16.msra.mxu0 0
    %657 = vmatprep.subr.bf16.mxu0 0
    %658 = vmatpush1.bf16.msra.mxu0 0
    %659 = vmatprep.subr.bf16.mxu0 0
    %660 = vmatpush1.bf16.msra.mxu0 0
    %661 = vmatprep.subr.bf16.mxu0 0
    %662 = vmatpush1.bf16.msra.mxu0 0
    %663 = vmatprep.subr.bf16.mxu0 0
    %664 = vmatpush1.bf16.msra.mxu0 0
    %665 = vmatprep.subr.bf16.mxu0 0
    %666 = vmatpush1.bf16.msra.mxu0 0
    %667 = vmatprep.subr.bf16.mxu0 0
    %668 = vmatpush1.bf16.msra.mxu0 0
    %669 = vmatprep.subr.bf16.mxu0 0
    %670 = vmatpush1.bf16.msra.mxu0 0
    %671 = vmatprep.subr.bf16.mxu0 0
    %672 = vmatpush1.bf16.msra.mxu0 0
    %673 = vmatprep.subr.bf16.mxu0 0
    %674 = vmatpush1.bf16.msra.mxu0 0
    %675 = vmatprep.mubr.bf16.mxu0 0
    %676 = vmatmul.mubr.bf16.gmra.mrb[0].mxu0 %v641
    %v677 = vpop.f32.mrb[0].mxu0
    %v678 = vadd.f32 0.0, %v677
    %v679 = vpop.f32.mrb[0].mxu0
    %v680 = vpop.f32.mrb[0].mxu0
    %v681 = vpop.f32.mrb[0].mxu0
    %682 = vdwg.mxu0
    %v683 = vadd.f32 %v639, %v678
    %v684 = vtanh.pop %v683
    %v685 = vxor.u32 %v683, 2147483648
    %v686 = vmul.f32 %v685, 1.442695
    %v687 = vpow.pop %v686
    %v688 = vadd.f32 %v687, 1.0
    %v689 = vrcp.pop %v688
    %v690 = vmul.f32 1.0, %v689
    %692 = vrot.lane.b32.xlu0 %v690, 96
    %v693 = vpop.permute.xlu0 %692
    %v695 = vmul.f32 %v684, %v693
    %696 = vrot.lane.b32.xlu0 %v690, 64
    %v697 = vpop.permute.xlu0 %696
    %v699 = vmul.f32 %v631, %v697
    %v700 = vadd.f32 %v695, %v699
    %v701 = vtanh.pop %v700
    %702 = vrot.lane.b32.xlu0 %v690, 32
    %v703 = vpop.permute.xlu0 %702
    %v705 = vmul.f32 %v701, %v703
    %v706 = vpack.c.bf16 %v705, %v705
    %vm707 = vcmask 257024
    %708 = vst.msk [vmem:[#allocation2] sm:$0xf] %vm707, %v706
    %709 = vst.msk [vmem:[#allocation3] sm:$0xff] %vm156, %v700
    // Predicated region
    $region22: #{tpu_custom_call.1} parent=1 // pred_check
      %p710 = pneg %p19
    $region23: #{tpu_custom_call.1} parent=1 // pred_check_branch
      %712 = sbr.rel (%p710) target = $region25
    $region24: #{tpu_custom_call.1} parent=1 // pred_region
      %v713 = vunpack.c.l.bf16 %v706
      %714 = vst.msk [vmem:[#allocation5] sm:$0xff] %vm156, %v713
    $region25: #{tpu_custom_call.1} parent=1 // pred_fallthru
      _
    // Predicated region
    $region26: #{tpu_custom_call.1} parent=1 // pred_check
      _
    $region27: #{tpu_custom_call.1} parent=1 // pred_check_branch
      %716 = sbr.rel (0) target = $region29
    $region28: #{tpu_custom_call.1} parent=1 // pred_region
      %s718 = ssub.s32 128, 128
      %719 = vsyncadd [#allocation6], %s718
      %s721 = sshll.u32 [#allocation5], 4
      %s722 = int_to_ptr.vmem [resolvable:$true] %s721
      %724 = dma.vmem_to_hbm [thread:$0]  %s722, 128, %s4, [#allocation6]
    $region29: #{tpu_custom_call.1} parent=1 // pred_fallthru
      _
    // Predicated region
    $region30: #{tpu_custom_call.1} parent=1 // pred_check
      _
    $region31: #{tpu_custom_call.1} parent=1 // pred_check_branch
      %726 = sbr.rel (0) target = $region33
    $region32: #{tpu_custom_call.1} parent=1 // pred_region
      %727 = dma.done [#allocation6], 128
    $region33: #{tpu_custom_call.1} parent=1 // pred_fallthru
      _
    %728 = vsyncpa [#allocation6], 1

// kernel: tpu_custom_call.1
$region0: #{tpu_custom_call.1}
  #allocation0 [shape = 'u32[]', space=smem, size = 0x4, offset = 0x4, fixed_abs, tag = 'smem constant byte address 0x4 - core index']
  #allocation1 [shape = 'u32[144,128]{1,0:T(1,128)}', space=vmem, size = 0x12000, scoped, tag = 'internal scratch']
  #allocation2 [shape = 'bf16[8,32]{1,0:T(8,128)(2,1)}', space=vmem, size = 0x800, scoped, tag = 'scratch operand']
  #allocation3 [shape = 'f32[8,32]{1,0:T(8,128)}', space=vmem, size = 0x1000, scoped, tag = 'scratch operand']
  #allocation4 [shape = 'f32[64,128]{1,0:T(8,128)}', space=vmem, size = 0x8000, scoped, tag = 'scratch operand']
  %s0 = inlined_call_operand.vmem [shape: f32[8,8,4], index: 0, kind: input, shape index: {}]
  %s1 = inlined_call_operand.vmem [shape: bf16[4,128], index: 1, kind: input, shape index: {}]
  %s2 = inlined_call_operand.vmem [shape: bf16[32,128], index: 2, kind: input, shape index: {}]
  %s3 = inlined_call_operand.vmem [shape: f32[1,128], index: 3, kind: input, shape index: {}]
  %s4 = inlined_call_operand.hbm [shape: f32[8,32], index: 4, kind: output, shape index: {}]
  %s5 = sld [smem:[#allocation0]]
  $region34: #{tpu_custom_call.1} parent=0
    _
  %s7 = ssub.s32 1, %s5
  %s8 = scalar_select 0, %s7, %s5
  $region1: #{tpu_custom_call.1} parent=0
    #allocation5 [shape = 'u8[4096]{0}', space=vmem, size = 0x1000, scoped, tag = 'output window, operand 0, single buffered']
    #allocation6 [shape = 's32[1]{0}', space=sflag, size = 0x4, scoped, tag = 'scoped memory for tpu_custom_call.1']
    %9 = vsyncpa [#allocation6], 0
    // Predicated region
    $region2: #{tpu_custom_call.1} parent=1 // pred_check
      _
    $region3: #{tpu_custom_call.1} parent=1 // pred_check_branch
      %11 = sbr.rel (0) target = $region5
    $region4: #{tpu_custom_call.1} parent=1 // pred_region
      _
    $region5: #{tpu_custom_call.1} parent=1 // pred_fallthru
      _
    // Predicated region
    $region6: #{tpu_custom_call.1} parent=1 // pred_check
      _
    $region7: #{tpu_custom_call.1} parent=1 // pred_check_branch
      %13 = sbr.rel (0) target = $region9
    $region8: #{tpu_custom_call.1} parent=1 // pred_region
      _
    $region9: #{tpu_custom_call.1} parent=1 // pred_fallthru
      _
    // Predicated region
    $region10: #{tpu_custom_call.1} parent=1 // pred_check
      _
    $region11: #{tpu_custom_call.1} parent=1 // pred_check_branch
      %15 = sbr.rel (0) target = $region13
    $region12: #{tpu_custom_call.1} parent=1 // pred_region
      _
    $region13: #{tpu_custom_call.1} parent=1 // pred_fallthru
      _
    // Predicated region
    $region14: #{tpu_custom_call.1} parent=1 // pred_check
      _
    $region15: #{tpu_custom_call.1} parent=1 // pred_check_branch
      %17 = sbr.rel (0) target = $region17
    $region16: #{tpu_custom_call.1} parent=1 // pred_region
      _
    $region17: #{tpu_custom_call.1} parent=1 // pred_fallthru
      _
    %p19 = scmp.eq.s32.totalorder 0, 0
    // Predicated region
    $region18: #{tpu_custom_call.1} parent=1 // pred_check
      %p20 = pneg %p19
    $region19: #{tpu_custom_call.1} parent=1 // pred_check_branch
      %22 = sbr.rel (%p20) target = $region21
    $region20: #{tpu_custom_call.1} parent=1 // pred_region
      %vm23 = vcmask 257024
      %24 = vst.msk [vmem:[#allocation2] sm:$0xf] %vm23, 0
      %vm25 = vcmask 261120
      %26 = vst.msk [vmem:[#allocation3] sm:$0xff] %vm25, 0.0
    $region21: #{tpu_custom_call.1} parent=1 // pred_fallthru
      _
    %v27 = vld [vmem:[%s0] sm:$0xff]
    %v28 = vld [vmem:[%s0 + $0x8] sm:$0xff]
    %v29 = vld [vmem:[%s0 + $0x10] sm:$0xff]
    %v30 = vld [vmem:[%s0 + $0x18] sm:$0xff]
    %v31 = vld [vmem:[%s0 + $0x20] sm:$0xff]
    %v32 = vld [vmem:[%s0 + $0x28] sm:$0xff]
    %v33 = vld [vmem:[%s0 + $0x30] sm:$0xff]
    %v34 = vld [vmem:[%s0 + $0x38] sm:$0xff]
    %v35 = vpack.c.bf16 %v28, %v27
    %v36 = vpack.c.bf16 %v30, %v29
    %v37 = vpack.c.bf16 %v32, %v31
    %v38 = vpack.c.bf16 %v34, %v33
    %v39 = vld [vmem:[%s1] sm:$0x3]
    %v40 = vld [vmem:[%s3] sm:$0x1]
    %v42 = vlaneseq
    %v43 = vshrl.u32 %v42, 7
    %v44 = vsub.s32 0, %v43
    %v45 = vrot.slane %v40, %v44
    %vm47 = vcmask 31744
    %v49 = vsel %vm47, %v35, 0
    %v52 = vsel %vm47, %v36, 0
    %v55 = vsel %vm47, %v37, 0
    %v58 = vsel %vm47, %v38, 0
    %vm60 = vcmask 1041408
    %v62 = vsel %vm60, %v39, 0
    %64 = vmatprep.subr.bf16.mxu0 0
    %65 = vmatpush1.bf16.msra.mxu0 %v62
    %66 = vmatprep.subr.bf16.mxu0 0
    %67 = vmatpush1.bf16.msra.mxu0 0
    %68 = vmatprep.subr.bf16.mxu0 0
    %69 = vmatpush1.bf16.msra.mxu0 0
    %70 = vmatprep.subr.bf16.mxu0 0
    %71 = vmatpush1.bf16.msra.mxu0 0
    %72 = vmatprep.subr.bf16.mxu0 0
    %73 = vmatpush1.bf16.msra.mxu0 0
    %74 = vmatprep.subr.bf16.mxu0 0
    %75 = vmatpush1.bf16.msra.mxu0 0
    %76 = vmatprep.subr.bf16.mxu0 0
    %77 = vmatpush1.bf16.msra.mxu0 0
    %78 = vmatprep.subr.bf16.mxu0 0
    %79 = vmatpush1.bf16.msra.mxu0 0
    %80 = vmatprep.subr.bf16.mxu0 0
    %81 = vmatpush1.bf16.msra.mxu0 0
    %82 = vmatprep.subr.bf16.mxu0 0
    %83 = vmatpush1.bf16.msra.mxu0 0
    %84 = vmatprep.subr.bf16.mxu0 0
    %85 = vmatpush1.bf16.msra.mxu0 0
    %86 = vmatprep.subr.bf16.mxu0 0
    %87 = vmatpush1.bf16.msra.mxu0 0
    %88 = vmatprep.subr.bf16.mxu0 0
    %89 = vmatpush1.bf16.msra.mxu0 0
    %90 = vmatprep.subr.bf16.mxu0 0
    %91 = vmatpush1.bf16.msra.mxu0 0
    %92 = vmatprep.subr.bf16.mxu0 0
    %93 = vmatpush1.bf16.msra.mxu0 0
    %94 = vmatprep.subr.bf16.mxu0 0
    %95 = vmatpush1.bf16.msra.mxu0 0
    %96 = vmatprep.mubr.bf16.mxu0 0
    %97 = vmatmul.mubr.bf16.gmra.mrb[0].mxu0 %v49
    %v98 = vpop.f32.mrb[0].mxu0
    %v99 = vadd.f32 %v45, %v98
    %v100 = vpop.f32.mrb[0].mxu0
    %v101 = vpop.f32.mrb[0].mxu0
    %v102 = vadd.f32 %v45, %v101
    %v103 = vpop.f32.mrb[0].mxu0
    %104 = vmatprep.mubr.bf16.mxu0 0
    %105 = vmatmul.mubr.bf16.gmra.mrb[0].mxu0 %v52
    %v106 = vpop.f32.mrb[0].mxu0
    %v107 = vadd.f32 %v45, %v106
    %v108 = vpop.f32.mrb[0].mxu0
    %v109 = vpop.f32.mrb[0].mxu0
    %v110 = vadd.f32 %v45, %v109
    %v111 = vpop.f32.mrb[0].mxu0
    %112 = vmatprep.mubr.bf16.mxu0 0
    %113 = vmatmul.mubr.bf16.gmra.mrb[0].mxu0 %v55
    %v114 = vpop.f32.mrb[0].mxu0
    %v115 = vadd.f32 %v45, %v114
    %v116 = vpop.f32.mrb[0].mxu0
    %v117 = vpop.f32.mrb[0].mxu0
    %v118 = vadd.f32 %v45, %v117
    %v119 = vpop.f32.mrb[0].mxu0
    %120 = vmatprep.mubr.bf16.mxu0 0
    %121 = vmatmul.mubr.bf16.gmra.mrb[0].mxu0 %v58
    %v122 = vpop.f32.mrb[0].mxu0
    %v123 = vadd.f32 %v45, %v122
    %v124 = vpop.f32.mrb[0].mxu0
    %v125 = vpop.f32.mrb[0].mxu0
    %v126 = vadd.f32 %v45, %v125
    %v127 = vpop.f32.mrb[0].mxu0
    %128 = vdwg.mxu0
    %129 = vst [vmem:[#allocation4] sm:$0xff] %v99
    %130 = vst [vmem:[#allocation4 + $0x8] sm:$0xff] %v102
    %131 = vst [vmem:[#allocation4 + $0x10] sm:$0xff] %v107
    %132 = vst [vmem:[#allocation4 + $0x18] sm:$0xff] %v110
    %133 = vst [vmem:[#allocation4 + $0x20] sm:$0xff] %v115
    %134 = vst [vmem:[#allocation4 + $0x28] sm:$0xff] %v118
    %135 = vst [vmem:[#allocation4 + $0x30] sm:$0xff] %v123
    %136 = vst [vmem:[#allocation4 + $0x38] sm:$0xff] %v126
    %v137 = vld [vmem:[%s2] sm:$0xf]
    %v138 = vld [vmem:[%s2 + $0x4] sm:$0xf]
    %v139 = vld [vmem:[%s2 + $0x8] sm:$0xf]
    %v140 = vld [vmem:[%s2 + $0xc] sm:$0xf]
    %v141 = vld [vmem:[#allocation2] sm:$0xf]
    %v142 = vld [vmem:[#allocation3] sm:$0xff]
    %v143 = vld [vmem:[#allocation4] sm:$0xff]
    %v148 = vunpack.c.l.b16 %v137
    %v149 = vunpack.c.l.b16 %v138
    %v150 = vunpack.c.l.b16 %v139
    %v151 = vunpack.c.l.b16 %v140
    %v152 = vpack.c.b16 %v149, %v148
    %v153 = vpack.c.b16 %v151, %v150
    %vm156 = vcmask 261120
    %v158 = vsel %vm156, %v141, 0
    %160 = vmatprep.subr.bf16.mxu0 0
    %161 = vmatpush1.bf16.msra.mxu0 %v152
    %162 = vmatprep.subr.bf16.mxu0 0
    %163 = vmatpush1.bf16.msra.mxu0 %v153
    %164 = vmatprep.subr.bf16.mxu0 0
    %165 = vmatpush1.bf16.msra.mxu0 0
    %166 = vmatprep.subr.bf16.mxu0 0
    %167 = vmatpush1.bf16.msra.mxu0 0
    %168 = vmatprep.subr.bf16.mxu0 0
    %169 = vmatpush1.bf16.msra.mxu0 0
    %170 = vmatprep.subr.bf16.mxu0 0
    %171 = vmatpush1.bf16.msra.mxu0 0
    %172 = vmatprep.subr.bf16.mxu0 0
    %173 = vmatpush1.bf16.msra.mxu0 0
    %174 = vmatprep.subr.bf16.mxu0 0
    %175 = vmatpush1.bf16.msra.mxu0 0
    %176 = vmatprep.subr.bf16.mxu0 0
    %177 = vmatpush1.bf16.msra.mxu0 0
    %178 = vmatprep.subr.bf16.mxu0 0
    %179 = vmatpush1.bf16.msra.mxu0 0
    %180 = vmatprep.subr.bf16.mxu0 0
    %181 = vmatpush1.bf16.msra.mxu0 0
    %182 = vmatprep.subr.bf16.mxu0 0
    %183 = vmatpush1.bf16.msra.mxu0 0
    %184 = vmatprep.subr.bf16.mxu0 0
    %185 = vmatpush1.bf16.msra.mxu0 0
    %186 = vmatprep.subr.bf16.mxu0 0
    %187 = vmatpush1.bf16.msra.mxu0 0
    %188 = vmatprep.subr.bf16.mxu0 0
    %189 = vmatpush1.bf16.msra.mxu0 0
    %190 = vmatprep.subr.bf16.mxu0 0
    %191 = vmatpush1.bf16.msra.mxu0 0
    %192 = vmatprep.mubr.bf16.mxu0 0
    %193 = vmatmul.mubr.bf16.gmra.mrb[0].mxu0 %v158
    %v194 = vpop.f32.mrb[0].mxu0
    %v195 = vadd.f32 0.0, %v194
    %v196 = vpop.f32.mrb[0].mxu0
    %v197 = vpop.f32.mrb[0].mxu0
    %v198 = vpop.f32.mrb[0].mxu0
    %199 = vdwg.mxu0
    %v200 = vadd.f32 %v143, %v195
    %v201 = vtanh.pop %v200
    %v202 = vxor.u32 %v200, 2147483648
    %v203 = vmul.f32 %v202, 1.442695
    %v204 = vpow.pop %v203
    %v205 = vadd.f32 %v204, 1.0
    %v206 = vrcp.pop %v205
    %v207 = vmul.f32 1.0, %v206
    %209 = vrot.lane.b32.xlu0 %v207, 96
    %v210 = vpop.permute.xlu0 %209
    %v212 = vmul.f32 %v201, %v210
    %213 = vrot.lane.b32.xlu0 %v207, 64
    %v214 = vpop.permute.xlu0 %213
    %v216 = vmul.f32 %v142, %v214
    %v217 = vadd.f32 %v212, %v216
    %v218 = vtanh.pop %v217
    %219 = vrot.lane.b32.xlu0 %v207, 32
    %v220 = vpop.permute.xlu0 %219
    %v222 = vmul.f32 %v218, %v220
    %v223 = vpack.c.bf16 %v222, %v222
    %s224 = scalar_lea.vmem [#allocation4], 8
    %v225 = vld [vmem:[%s224] sm:$0xff]
    %v227 = vsel %vm156, %v223, 0
    %229 = vmatprep.subr.bf16.mxu0 0
    %230 = vmatpush1.bf16.msra.mxu0 %v152
    %231 = vmatprep.subr.bf16.mxu0 0
    %232 = vmatpush1.bf16.msra.mxu0 %v153
    %233 = vmatprep.subr.bf16.mxu0 0
    %234 = vmatpush1.bf16.msra.mxu0 0
    %235 = vmatprep.subr.bf16.mxu0 0
    %236 = vmatpush1.bf16.msra.mxu0 0
    %237 = vmatprep.subr.bf16.mxu0 0
    %238 = vmatpush1.bf16.msra.mxu0 0
    %239 = vmatprep.subr.bf16.mxu0 0
    %240 = vmatpush1.bf16.msra.mxu0 0
    %241 = vmatprep.subr.bf16.mxu0 0
    %242 = vmatpush1.bf16.msra.mxu0 0
    %243 = vmatprep.subr.bf16.mxu0 0
    %244 = vmatpush1.bf16.msra.mxu0 0
    %245 = vmatprep.subr.bf16.mxu0 0
    %246 = vmatpush1.bf16.msra.mxu0 0
    %247 = vmatprep.subr.bf16.mxu0 0
    %248 = vmatpush1.bf16.msra.mxu0 0
    %249 = vmatprep.subr.bf16.mxu0 0
    %250 = vmatpush1.bf16.msra.mxu0 0
    %251 = vmatprep.subr.bf16.mxu0 0
    %252 = vmatpush1.bf16.msra.mxu0 0
    %253 = vmatprep.subr.bf16.mxu0 0
    %254 = vmatpush1.bf16.msra.mxu0 0
    %255 = vmatprep.subr.bf16.mxu0 0
    %256 = vmatpush1.bf16.msra.mxu0 0
    %257 = vmatprep.subr.bf16.mxu0 0
    %258 = vmatpush1.bf16.msra.mxu0 0
    %259 = vmatprep.subr.bf16.mxu0 0
    %260 = vmatpush1.bf16.msra.mxu0 0
    %261 = vmatprep.mubr.bf16.mxu0 0
    %262 = vmatmul.mubr.bf16.gmra.mrb[0].mxu0 %v227
    %v263 = vpop.f32.mrb[0].mxu0
    %v264 = vadd.f32 0.0, %v263
    %v265 = vpop.f32.mrb[0].mxu0
    %v266 = vpop.f32.mrb[0].mxu0
    %v267 = vpop.f32.mrb[0].mxu0
    %268 = vdwg.mxu0
    %v269 = vadd.f32 %v225, %v264
    %v270 = vtanh.pop %v269
    %v271 = vxor.u32 %v269, 2147483648
    %v272 = vmul.f32 %v271, 1.442695
    %v273 = vpow.pop %v272
    %v274 = vadd.f32 %v273, 1.0
    %v275 = vrcp.pop %v274
    %v276 = vmul.f32 1.0, %v275
    %278 = vrot.lane.b32.xlu0 %v276, 96
    %v279 = vpop.permute.xlu0 %278
    %v281 = vmul.f32 %v270, %v279
    %282 = vrot.lane.b32.xlu0 %v276, 64
    %v283 = vpop.permute.xlu0 %282
    %v285 = vmul.f32 %v217, %v283
    %v286 = vadd.f32 %v281, %v285
    %v287 = vtanh.pop %v286
    %288 = vrot.lane.b32.xlu0 %v276, 32
    %v289 = vpop.permute.xlu0 %288
    %v291 = vmul.f32 %v287, %v289
    %v292 = vpack.c.bf16 %v291, %v291
    %s293 = scalar_lea.vmem [#allocation4], 16
    %v294 = vld [vmem:[%s293] sm:$0xff]
    %v296 = vsel %vm156, %v292, 0
    %298 = vmatprep.subr.bf16.mxu0 0
    %299 = vmatpush1.bf16.msra.mxu0 %v152
    %300 = vmatprep.subr.bf16.mxu0 0
    %301 = vmatpush1.bf16.msra.mxu0 %v153
    %302 = vmatprep.subr.bf16.mxu0 0
    %303 = vmatpush1.bf16.msra.mxu0 0
    %304 = vmatprep.subr.bf16.mxu0 0
    %305 = vmatpush1.bf16.msra.mxu0 0
    %306 = vmatprep.subr.bf16.mxu0 0
    %307 = vmatpush1.bf16.msra.mxu0 0
    %308 = vmatprep.subr.bf16.mxu0 0
    %309 = vmatpush1.bf16.msra.mxu0 0
    %310 = vmatprep.subr.bf16.mxu0 0
    %311 = vmatpush1.bf16.msra.mxu0 0
    %312 = vmatprep.subr.bf16.mxu0 0
    %313 = vmatpush1.bf16.msra.mxu0 0
    %314 = vmatprep.subr.bf16.mxu0 0
    %315 = vmatpush1.bf16.msra.mxu0 0
    %316 = vmatprep.subr.bf16.mxu0 0
    %317 = vmatpush1.bf16.msra.mxu0 0
    %318 = vmatprep.subr.bf16.mxu0 0
    %319 = vmatpush1.bf16.msra.mxu0 0
    %320 = vmatprep.subr.bf16.mxu0 0
    %321 = vmatpush1.bf16.msra.mxu0 0
    %322 = vmatprep.subr.bf16.mxu0 0
    %323 = vmatpush1.bf16.msra.mxu0 0
    %324 = vmatprep.subr.bf16.mxu0 0
    %325 = vmatpush1.bf16.msra.mxu0 0
    %326 = vmatprep.subr.bf16.mxu0 0
    %327 = vmatpush1.bf16.msra.mxu0 0
    %328 = vmatprep.subr.bf16.mxu0 0
    %329 = vmatpush1.bf16.msra.mxu0 0
    %330 = vmatprep.mubr.bf16.mxu0 0
    %331 = vmatmul.mubr.bf16.gmra.mrb[0].mxu0 %v296
    %v332 = vpop.f32.mrb[0].mxu0
    %v333 = vadd.f32 0.0, %v332
    %v334 = vpop.f32.mrb[0].mxu0
    %v335 = vpop.f32.mrb[0].mxu0
    %v336 = vpop.f32.mrb[0].mxu0
    %337 = vdwg.mxu0
    %v338 = vadd.f32 %v294, %v333
    %v339 = vtanh.pop %v338
    %v340 = vxor.u32 %v338, 2147483648
    %v341 = vmul.f32 %v340, 1.442695
    %v342 = vpow.pop %v341
    %v343 = vadd.f32 %v342, 1.0
    %v344 = vrcp.pop %v343
    %v345 = vmul.f32 1.0, %v344
    %347 = vrot.lane.b32.xlu0 %v345, 96
    %v348 = vpop.permute.xlu0 %347
    %v350 = vmul.f32 %v339, %v348
    %351 = vrot.lane.b32.xlu0 %v345, 64
    %v352 = vpop.permute.xlu0 %351
    %v354 = vmul.f32 %v286, %v352
    %v355 = vadd.f32 %v350, %v354
    %v356 = vtanh.pop %v355
    %357 = vrot.lane.b32.xlu0 %v345, 32
    %v358 = vpop.permute.xlu0 %357
    %v360 = vmul.f32 %v356, %v358
    %v361 = vpack.c.bf16 %v360, %v360
    %s362 = scalar_lea.vmem [#allocation4], 24
    %v363 = vld [vmem:[%s362] sm:$0xff]
    %v365 = vsel %vm156, %v361, 0
    %367 = vmatprep.subr.bf16.mxu0 0
    %368 = vmatpush1.bf16.msra.mxu0 %v152
    %369 = vmatprep.subr.bf16.mxu0 0
    %370 = vmatpush1.bf16.msra.mxu0 %v153
    %371 = vmatprep.subr.bf16.mxu0 0
    %372 = vmatpush1.bf16.msra.mxu0 0
    %373 = vmatprep.subr.bf16.mxu0 0
    %374 = vmatpush1.bf16.msra.mxu0 0
    %375 = vmatprep.subr.bf16.mxu0 0
    %376 = vmatpush1.bf16.msra.mxu0 0
    %377 = vmatprep.subr.bf16.mxu0 0
    %378 = vmatpush1.bf16.msra.mxu0 0
    %379 = vmatprep.subr.bf16.mxu0 0
    %380 = vmatpush1.bf16.msra.mxu0 0
    %381 = vmatprep.subr.bf16.mxu0 0
    %382 = vmatpush1.bf16.msra.mxu0 0
    %383 = vmatprep.subr.bf16.mxu0 0
    %384 = vmatpush1.bf16.msra.mxu0 0
    %385 = vmatprep.subr.bf16.mxu0 0
    %386 = vmatpush1.bf16.msra.mxu0 0
    %387 = vmatprep.subr.bf16.mxu0 0
    %388 = vmatpush1.bf16.msra.mxu0 0
    %389 = vmatprep.subr.bf16.mxu0 0
    %390 = vmatpush1.bf16.msra.mxu0 0
    %391 = vmatprep.subr.bf16.mxu0 0
    %392 = vmatpush1.bf16.msra.mxu0 0
    %393 = vmatprep.subr.bf16.mxu0 0
    %394 = vmatpush1.bf16.msra.mxu0 0
    %395 = vmatprep.subr.bf16.mxu0 0
    %396 = vmatpush1.bf16.msra.mxu0 0
    %397 = vmatprep.subr.bf16.mxu0 0
    %398 = vmatpush1.bf16.msra.mxu0 0
    %399 = vmatprep.mubr.bf16.mxu0 0
    %400 = vmatmul.mubr.bf16.gmra.mrb[0].mxu0 %v365
    %v401 = vpop.f32.mrb[0].mxu0
    %v402 = vadd.f32 0.0, %v401
    %v403 = vpop.f32.mrb[0].mxu0
    %v404 = vpop.f32.mrb[0].mxu0
    %v405 = vpop.f32.mrb[0].mxu0
    %406 = vdwg.mxu0
    %v407 = vadd.f32 %v363, %v402
    %v408 = vtanh.pop %v407
    %v409 = vxor.u32 %v407, 2147483648
    %v410 = vmul.f32 %v409, 1.442695
    %v411 = vpow.pop %v410
    %v412 = vadd.f32 %v411, 1.0
    %v413 = vrcp.pop %v412
    %v414 = vmul.f32 1.0, %v413
    %416 = vrot.lane.b32.xlu0 %v414, 96
    %v417 = vpop.permute.xlu0 %416
    %v419 = vmul.f32 %v408, %v417
    %420 = vrot.lane.b32.xlu0 %v414, 64
    %v421 = vpop.permute.xlu0 %420
    %v423 = vmul.f32 %v355, %v421
    %v424 = vadd.f32 %v419, %v423
    %v425 = vtanh.pop %v424
    %426 = vrot.lane.b32.xlu0 %v414, 32
    %v427 = vpop.permute.xlu0 %426
    %v429 = vmul.f32 %v425, %v427
    %v430 = vpack.c.bf16 %v429, %v429
    %s431 = scalar_lea.vmem [#allocation4], 32
    %v432 = vld [vmem:[%s431] sm:$0xff]
    %v434 = vsel %vm156, %v430, 0
    %436 = vmatprep.subr.bf16.mxu0 0
    %437 = vmatpush1.bf16.msra.mxu0 %v152
    %438 = vmatprep.subr.bf16.mxu0 0
    %439 = vmatpush1.bf16.msra.mxu0 %v153
    %440 = vmatprep.subr.bf16.mxu0 0
    %441 = vmatpush1.bf16.msra.mxu0 0
    %442 = vmatprep.subr.bf16.mxu0 0
    %443 = vmatpush1.bf16.msra.mxu0 0
    %444 = vmatprep.subr.bf16.mxu0 0
    %445 = vmatpush1.bf16.msra.mxu0 0
    %446 = vmatprep.subr.bf16.mxu0 0
    %447 = vmatpush1.bf16.msra.mxu0 0
    %448 = vmatprep.subr.bf16.mxu0 0
    %449 = vmatpush1.bf16.msra.mxu0 0
    %450 = vmatprep.subr.bf16.mxu0 0
    %451 = vmatpush1.bf16.msra.mxu0 0
    %452 = vmatprep.subr.bf16.mxu0 0
    %453 = vmatpush1.bf16.msra.mxu0 0
    %454 = vmatprep.subr.bf16.mxu0 0
    %455 = vmatpush1.bf16.msra.mxu0 0
    %456 = vmatprep.subr.bf16.mxu0 0
    %457 = vmatpush1.bf16.msra.mxu0 0
    %458 = vmatprep.subr.bf16.mxu0 0
    %459 = vmatpush1.bf16.msra.mxu0 0
    %460 = vmatprep.subr.bf16.mxu0 0
    %461 = vmatpush1.bf16.msra.mxu0 0
    %462 = vmatprep.subr.bf16.mxu0 0
    %463 = vmatpush1.bf16.msra.mxu0 0
    %464 = vmatprep.subr.bf16.mxu0 0
    %465 = vmatpush1.bf16.msra.mxu0 0
    %466 = vmatprep.subr.bf16.mxu0 0
    %467 = vmatpush1.bf16.msra.mxu0 0
    %468 = vmatprep.mubr.bf16.mxu0 0
    %469 = vmatmul.mubr.bf16.gmra.mrb[0].mxu0 %v434
    %v470 = vpop.f32.mrb[0].mxu0
    %v471 = vadd.f32 0.0, %v470
    %v472 = vpop.f32.mrb[0].mxu0
    %v473 = vpop.f32.mrb[0].mxu0
    %v474 = vpop.f32.mrb[0].mxu0
    %475 = vdwg.mxu0
    %v476 = vadd.f32 %v432, %v471
    %v477 = vtanh.pop %v476
    %v478 = vxor.u32 %v476, 2147483648
    %v479 = vmul.f32 %v478, 1.442695
    %v480 = vpow.pop %v479
    %v481 = vadd.f32 %v480, 1.0
    %v482 = vrcp.pop %v481
    %v483 = vmul.f32 1.0, %v482
    %485 = vrot.lane.b32.xlu0 %v483, 96
    %v486 = vpop.permute.xlu0 %485
    %v488 = vmul.f32 %v477, %v486
    %489 = vrot.lane.b32.xlu0 %v483, 64
    %v490 = vpop.permute.xlu0 %489
    %v492 = vmul.f32 %v424, %v490
    %v493 = vadd.f32 %v488, %v492
    %v494 = vtanh.pop %v493
    %495 = vrot.lane.b32.xlu0 %v483, 32
    %v496 = vpop.permute.xlu0 %495
    %v498 = vmul.f32 %v494, %v496
    %v499 = vpack.c.bf16 %v498, %v498
    %s500 = scalar_lea.vmem [#allocation4], 40
    %v501 = vld [vmem:[%s500] sm:$0xff]
    %v503 = vsel %vm156, %v499, 0
    %505 = vmatprep.subr.bf16.mxu0 0
    %506 = vmatpush1.bf16.msra.mxu0 %v152
    %507 = vmatprep.subr.bf16.mxu0 0
    %508 = vmatpush1.bf16.msra.mxu0 %v153
    %509 = vmatprep.subr.bf16.mxu0 0
    %510 = vmatpush1.bf16.msra.mxu0 0
    %511 = vmatprep.subr.bf16.mxu0 0
    %512 = vmatpush1.bf16.msra.mxu0 0
    %513 = vmatprep.subr.bf16.mxu0 0
    %514 = vmatpush1.bf16.msra.mxu0 0
    %515 = vmatprep.subr.bf16.mxu0 0
    %516 = vmatpush1.bf16.msra.mxu0 0
    %517 = vmatprep.subr.bf16.mxu0 0
    %518 = vmatpush1.bf16.msra.mxu0 0
    %519 = vmatprep.subr.bf16.mxu0 0
    %520 = vmatpush1.bf16.msra.mxu0 0
    %521 = vmatprep.subr.bf16.mxu0 0
    %522 = vmatpush1.bf16.msra.mxu0 0
    %523 = vmatprep.subr.bf16.mxu0 0
    %524 = vmatpush1.bf16.msra.mxu0 0
    %525 = vmatprep.subr.bf16.mxu0 0
    %526 = vmatpush1.bf16.msra.mxu0 0
    %527 = vmatprep.subr.bf16.mxu0 0
    %528 = vmatpush1.bf16.msra.mxu0 0
    %529 = vmatprep.subr.bf16.mxu0 0
    %530 = vmatpush1.bf16.msra.mxu0 0
    %531 = vmatprep.subr.bf16.mxu0 0
    %532 = vmatpush1.bf16.msra.mxu0 0
    %533 = vmatprep.subr.bf16.mxu0 0
    %534 = vmatpush1.bf16.msra.mxu0 0
    %535 = vmatprep.subr.bf16.mxu0 0
    %536 = vmatpush1.bf16.msra.mxu0 0
    %537 = vmatprep.mubr.bf16.mxu0 0
    %538 = vmatmul.mubr.bf16.gmra.mrb[0].mxu0 %v503
    %v539 = vpop.f32.mrb[0].mxu0
    %v540 = vadd.f32 0.0, %v539
    %v541 = vpop.f32.mrb[0].mxu0
    %v542 = vpop.f32.mrb[0].mxu0
    %v543 = vpop.f32.mrb[0].mxu0
    %544 = vdwg.mxu0
    %v545 = vadd.f32 %v501, %v540
    %v546 = vtanh.pop %v545
    %v547 = vxor.u32 %v545, 2147483648
    %v548 = vmul.f32 %v547, 1.442695
    %v549 = vpow.pop %v548
    %v550 = vadd.f32 %v549, 1.0
    %v551 = vrcp.pop %v550
    %v552 = vmul.f32 1.0, %v551
    %554 = vrot.lane.b32.xlu0 %v552, 96
    %v555 = vpop.permute.xlu0 %554
    %v557 = vmul.f32 %v546, %v555
    %558 = vrot.lane.b32.xlu0 %v552, 64
    %v559 = vpop.permute.xlu0 %558
    %v561 = vmul.f32 %v493, %v559
    %v562 = vadd.f32 %v557, %v561
    %v563 = vtanh.pop %v562
    %564 = vrot.lane.b32.xlu0 %v552, 32
    %v565 = vpop.permute.xlu0 %564
    %v567 = vmul.f32 %v563, %v565
    %v568 = vpack.c.bf16 %v567, %v567
    %s569 = scalar_lea.vmem [#allocation4], 48
    %v570 = vld [vmem:[%s569] sm:$0xff]
    %v572 = vsel %vm156, %v568, 0
    %574 = vmatprep.subr.bf16.mxu0 0
    %575 = vmatpush1.bf16.msra.mxu0 %v152
    %576 = vmatprep.subr.bf16.mxu0 0
    %577 = vmatpush1.bf16.msra.mxu0 %v153
    %578 = vmatprep.subr.bf16.mxu0 0
    %579 = vmatpush1.bf16.msra.mxu0 0
    %580 = vmatprep.subr.bf16.mxu0 0
    %581 = vmatpush1.bf16.msra.mxu0 0
    %582 = vmatprep.subr.bf16.mxu0 0
    %583 = vmatpush1.bf16.msra.mxu0 0
    %584 = vmatprep.subr.bf16.mxu0 0
    %585 = vmatpush1.bf16.msra.mxu0 0
    %586 = vmatprep.subr.bf16.mxu0 0
    %587 = vmatpush1.bf16.msra.mxu0 0
    %588 = vmatprep.subr.bf16.mxu0 0
    %589 = vmatpush1.bf16.msra.mxu0 0
    %590 = vmatprep.subr.bf16.mxu0 0
    %591 = vmatpush1.bf16.msra.mxu0 0
    %592 = vmatprep.subr.bf16.mxu0 0
    %593 = vmatpush1.bf16.msra.mxu0 0
    %594 = vmatprep.subr.bf16.mxu0 0
    %595 = vmatpush1.bf16.msra.mxu0 0
    %596 = vmatprep.subr.bf16.mxu0 0
    %597 = vmatpush1.bf16.msra.mxu0 0
    %598 = vmatprep.subr.bf16.mxu0 0
    %599 = vmatpush1.bf16.msra.mxu0 0
    %600 = vmatprep.subr.bf16.mxu0 0
    %601 = vmatpush1.bf16.msra.mxu0 0
    %602 = vmatprep.subr.bf16.mxu0 0
    %603 = vmatpush1.bf16.msra.mxu0 0
    %604 = vmatprep.subr.bf16.mxu0 0
    %605 = vmatpush1.bf16.msra.mxu0 0
    %606 = vmatprep.mubr.bf16.mxu0 0
    %607 = vmatmul.mubr.bf16.gmra.mrb[0].mxu0 %v572
    %v608 = vpop.f32.mrb[0].mxu0
    %v609 = vadd.f32 0.0, %v608
    %v610 = vpop.f32.mrb[0].mxu0
    %v611 = vpop.f32.mrb[0].mxu0
    %v612 = vpop.f32.mrb[0].mxu0
    %613 = vdwg.mxu0
    %v614 = vadd.f32 %v570, %v609
    %v615 = vtanh.pop %v614
    %v616 = vxor.u32 %v614, 2147483648
    %v617 = vmul.f32 %v616, 1.442695
    %v618 = vpow.pop %v617
    %v619 = vadd.f32 %v618, 1.0
    %v620 = vrcp.pop %v619
    %v621 = vmul.f32 1.0, %v620
    %623 = vrot.lane.b32.xlu0 %v621, 96
    %v624 = vpop.permute.xlu0 %623
    %v626 = vmul.f32 %v615, %v624
    %627 = vrot.lane.b32.xlu0 %v621, 64
    %v628 = vpop.permute.xlu0 %627
    %v630 = vmul.f32 %v562, %v628
    %v631 = vadd.f32 %v626, %v630
    %v632 = vtanh.pop %v631
    %633 = vrot.lane.b32.xlu0 %v621, 32
    %v634 = vpop.permute.xlu0 %633
    %v636 = vmul.f32 %v632, %v634
    %v637 = vpack.c.bf16 %v636, %v636
    %s638 = scalar_lea.vmem [#allocation4], 56
    %v639 = vld [vmem:[%s638] sm:$0xff]
    %v641 = vsel %vm156, %v637, 0
    %643 = vmatprep.subr.bf16.mxu0 0
    %644 = vmatpush1.bf16.msra.mxu0 %v152
    %645 = vmatprep.subr.bf16.mxu0 0
    %646 = vmatpush1.bf16.msra.mxu0 %v153
    %647 = vmatprep.subr.bf16.mxu0 0
    %648 = vmatpush1.bf16.msra.mxu0 0
    %649 = vmatprep.subr.bf16.mxu0 0
    %650 = vmatpush1.bf16.msra.mxu0 0
    %651 = vmatprep.subr.bf16.mxu0 0
    %652 = vmatpush1.bf16.msra.mxu0 0
    %653 = vmatprep.subr.bf16.mxu0 0
    %654 = vmatpush1.bf16.msra.mxu0 0
    %655 = vmatprep.subr.bf16.mxu0 0
    %656 = vmatpush1.bf16.msra.mxu0 0
    %657 = vmatprep.subr.bf16.mxu0 0
    %658 = vmatpush1.bf16.msra.mxu0 0
    %659 = vmatprep.subr.bf16.mxu0 0
    %660 = vmatpush1.bf16.msra.mxu0 0
    %661 = vmatprep.subr.bf16.mxu0 0
    %662 = vmatpush1.bf16.msra.mxu0 0
    %663 = vmatprep.subr.bf16.mxu0 0
    %664 = vmatpush1.bf16.msra.mxu0 0
    %665 = vmatprep.subr.bf16.mxu0 0
    %666 = vmatpush1.bf16.msra.mxu0 0
    %667 = vmatprep.subr.bf16.mxu0 0
    %668 = vmatpush1.bf16.msra.mxu0 0
    %669 = vmatprep.subr.bf16.mxu0 0
    %670 = vmatpush1.bf16.msra.mxu0 0
    %671 = vmatprep.subr.bf16.mxu0 0
    %672 = vmatpush1.bf16.msra.mxu0 0
    %673 = vmatprep.subr.bf16.mxu0 0
    %674 = vmatpush1.bf16.msra.mxu0 0
    %675 = vmatprep.mubr.bf16.mxu0 0
    %676 = vmatmul.mubr.bf16.gmra.mrb[0].mxu0 %v641
    %v677 = vpop.f32.mrb[0].mxu0
    %v678 = vadd.f32 0.0, %v677
    %v679 = vpop.f32.mrb[0].mxu0
    %v680 = vpop.f32.mrb[0].mxu0
    %v681 = vpop.f32.mrb[0].mxu0
    %682 = vdwg.mxu0
    %v683 = vadd.f32 %v639, %v678
    %v684 = vtanh.pop %v683
    %v685 = vxor.u32 %v683, 2147483648
    %v686 = vmul.f32 %v685, 1.442695
    %v687 = vpow.pop %v686
    %v688 = vadd.f32 %v687, 1.0
    %v689 = vrcp.pop %v688
    %v690 = vmul.f32 1.0, %v689
    %692 = vrot.lane.b32.xlu0 %v690, 96
    %v693 = vpop.permute.xlu0 %692
    %v695 = vmul.f32 %v684, %v693
    %696 = vrot.lane.b32.xlu0 %v690, 64
    %v697 = vpop.permute.xlu0 %696
    %v699 = vmul.f32 %v631, %v697
    %v700 = vadd.f32 %v695, %v699
    %v701 = vtanh.pop %v700
    %702 = vrot.lane.b32.xlu0 %v690, 32
    %v703 = vpop.permute.xlu0 %702
    %v705 = vmul.f32 %v701, %v703
    %v706 = vpack.c.bf16 %v705, %v705
    %vm707 = vcmask 257024
    %708 = vst.msk [vmem:[#allocation2] sm:$0xf] %vm707, %v706
    %709 = vst.msk [vmem:[#allocation3] sm:$0xff] %vm156, %v700
    // Predicated region
    $region22: #{tpu_custom_call.1} parent=1 // pred_check
      %p710 = pneg %p19
    $region23: #{tpu_custom_call.1} parent=1 // pred_check_branch
      %712 = sbr.rel (%p710) target = $region25
    $region24: #{tpu_custom_call.1} parent=1 // pred_region
      %v713 = vunpack.c.l.bf16 %v706
      %714 = vst.msk [vmem:[#allocation5] sm:$0xff] %vm156, %v713
    $region25: #{tpu_custom_call.1} parent=1 // pred_fallthru
      _
    // Predicated region
    $region26: #{tpu_custom_call.1} parent=1 // pred_check
      _
    $region27: #{tpu_custom_call.1} parent=1 // pred_check_branch
      %716 = sbr.rel (0) target = $region29
    $region28: #{tpu_custom_call.1} parent=1 // pred_region
      %s718 = ssub.s32 128, 128
      %719 = vsyncadd [#allocation6], %s718
      %s721 = sshll.u32 [#allocation5], 4
      %s722 = int_to_ptr.vmem [resolvable:$true] %s721
      %724 = dma.vmem_to_hbm [thread:$0]  %s722, 128, %s4, [#allocation6]
    $region29: #{tpu_custom_call.1} parent=1 // pred_fallthru
      _
    // Predicated region
    $region30: #{tpu_custom_call.1} parent=1 // pred_check
      _
    $region31: #{tpu_custom_call.1} parent=1 // pred_check_branch
      %726 = sbr.rel (0) target = $region33
    $region32: #{tpu_custom_call.1} parent=1 // pred_region
      %727 = dma.done [#allocation6], 128
    $region33: #{tpu_custom_call.1} parent=1 // pred_fallthru
      _
    %728 = vsyncpa [#allocation6], 1

</llo_original>
